<compile_context>
chip_gen: v6e
topology: v6e:2x2x1
jax: 0.10.0
libtpu: 0.0.40
codegen_flags: <defaults>
</compile_context>

<pallas_src>
import math
from functools import partial

import jax
import jax.numpy as jnp
from jax import lax
from jax.experimental import pallas as pl
from jax.experimental.pallas import tpu as pltpu  # noqa: F401  (kept for the grid=(B,) production variant)

# ---------------- model config (small, consistent with the module) ----------
DIM = 32          # token channel dim
HEADS = 4
DIM_HEAD = 8
INNER = HEADS * DIM_HEAD   # 32
MLP_DIM = 64
B = 2             # batch
NQ = 8            # number of query tokens
NK = 16           # number of key tokens
EPS = 1e-5
DTYPE = jnp.float32

NEG_BIG = -1e30            # additive cross-batch mask value
WSLAB_W = 3 * INNER        # lane width of the packed weight slab  [Wq*s | Wk | Wv]


# ---------------- in-kernel helpers ------------------------------------------
def _layernorm(x, g, b):
    mu = jnp.mean(x, axis=-1, keepdims=True)
    var = jnp.mean((x - mu) ** 2, axis=-1, keepdims=True)
    return (x - mu) * lax.rsqrt(var + EPS) * g + b


def _erf(x):
    """erf via Abramowitz & Stegun 7.1.26 (|err| < 1.5e-7, ~f32 exact).

    Uses only exp / mul / add / where so it is guaranteed to lower in Mosaic; the
    extra VPU ops are free in this launch-bound regime.
    """
    a1, a2, a3, a4, a5 = 0.254829592, -0.284496736, 1.421413741, -1.453152027, 1.061405429
    pp = 0.3275911
    sgn = jnp.where(x >= 0.0, 1.0, -1.0)
    ax = jnp.abs(x)
    t = 1.0 / (1.0 + pp * ax)
    poly = ((((a5 * t + a4) * t + a3) * t + a2) * t + a1) * t
    return sgn * (1.0 - poly * jnp.exp(-ax * ax))


def _mha(Q, K, V, *, batch, nq, nk, heads, dim_head):
    """All heads AND all batch elements in one score dot, one softmax, one p@V dot.

    Q: (batch*nq, inner)  -- dim_head**-0.5 already folded into Wq.
    K, V: (batch*nk, inner)

    Heads are stacked along the sublane axis with a block-diagonal channel mask;
    batches are separated with an additive -1e30 mask on the scores so softmax
    denominators never mix.  Returns (batch*nq, inner), layout 'b n (h d)'.
    """
    inner = heads * dim_head
    bnq = batch * nq
    bnk = batch * nk
    rows = heads * bnq

    # ---- masks, generated in-kernel (no DMA).  Only iota + compares + adds.
    ri = lax.broadcasted_iota(jnp.int32, (rows, inner), 0)
    ci = lax.broadcasted_iota(jnp.int32, (rows, inner), 1)
    row_head = jnp.zeros((rows, inner), jnp.int32)
    col_head = jnp.zeros((rows, inner), jnp.int32)
    for h in range(1, heads):
        row_head = row_head + (ri >= h * bnq).astype(jnp.int32)
        col_head = col_head + (ci >= h * dim_head).astype(jnp.int32)
    head_mask = (row_head == col_head).astype(jnp.float32)            # (rows, inner)

    rj = lax.broadcasted_iota(jnp.int32, (rows, bnk), 0)
    cj = lax.broadcasted_iota(jnp.int32, (rows, bnk), 1)
    same_batch = jnp.zeros((rows, bnk), jnp.bool_)
    for h in range(heads):
        for b in range(batch):
            r_lo = h * bnq + b * nq
            c_lo = b * nk
            blk = ((rj >= r_lo) & (rj < r_lo + nq)) & ((cj >= c_lo) & (cj < c_lo + nk))
            same_batch = same_batch | blk
    batch_bias = jnp.where(same_batch, 0.0, NEG_BIG)                  # (rows, bnk)

    # ---- replicate Q once per head along sublanes (broadcast, not a concat chain)
    Qs = jnp.broadcast_to(Q[None], (heads, bnq, inner)).reshape(rows, inner) * head_mask

    # ---- ONE score dot for every (head, batch) pair
    s = lax.dot_general(Qs, K, (((1,), (1,)), ((), ())),
                        preferred_element_type=jnp.float32)           # (rows, bnk)
    s = s + batch_bias
    s = s - jnp.max(s, axis=-1, keepdims=True)
    e = jnp.exp(s)
    p = e / jnp.sum(e, axis=-1, keepdims=True)                        # exact divide

    # ---- ONE p @ V dot, then fold head blocks back onto their own channels
    o = jnp.dot(p, V, preferred_element_type=jnp.float32) * head_mask  # (rows, inner)
    acc = o[0:bnq]
    for h in range(1, heads):
        acc = acc + o[h * bnq:(h + 1) * bnq]
    return acc                                                         # (bnq, inner)


# ---------------- fused block kernel ------------------------------------------
def _attention_block_kernel(q_ref, k_ref, qpe_ref, kpe_ref, w_ref, pv_ref, o_ref,
                            *, batch, nq, nk, dim, heads, dim_head, mlp_dim):
    inner = heads * dim_head
    bnq = batch * nq
    bnk = batch * nk

    queries = q_ref[...]        # (bnq, dim)
    keys = k_ref[...]           # (bnk, dim)
    qpe = qpe_ref[...]          # (bnq, dim)
    kpe = kpe_ref[...]          # (bnk, dim)

    # ---- unpack the two parameter slabs with static, 8-row-aligned views --------
    r = 0
    sa_w = w_ref[r:r + dim, :]; r += dim               # (dim, 3*inner) [Wq*s | Wk | Wv]
    ca_w = w_ref[r:r + dim, :]; r += dim               # (dim, 3*inner)
    sa_wp = w_ref[r:r + inner, 0:dim]; r += inner      # (inner, dim)
    ca_wp = w_ref[r:r + inner, 0:dim]; r += inner      # (inner, dim)
    ff_w1 = w_ref[r:r + dim, 0:mlp_dim]; r += dim      # (dim, mlp_dim)
    ff_w2 = w_ref[r:r + mlp_dim, 0:dim]                # (mlp_dim, dim)

    pv = pv_ref[...]                                   # (10, mlp_dim)
    sa_bp = pv[0:1, 0:dim]
    ca_bp = pv[1:2, 0:dim]
    ff_b1 = pv[2:3, 0:mlp_dim]
    ff_b2 = pv[3:4, 0:dim]
    ln1_g, ln1_b = pv[4:5, 0:dim], pv[5:6, 0:dim]
    ln2_g, ln2_b = pv[6:7, 0:dim], pv[7:8, 0:dim]
    ln3_g, ln3_b = pv[8:9, 0:dim], pv[9:10, 0:dim]

    # ---- self attention: q = k = queries + qpe, v = queries ---------------------
    # one stacked projection dot: [x_sa ; queries] @ [Wq*s | Wk | Wv]
    x_sa = queries + qpe
    sa_in = jnp.concatenate([x_sa, queries], axis=0)                    # (2*bnq, dim)
    sa_res = jnp.dot(sa_in, sa_w, preferred_element_type=jnp.float32)   # (2*bnq, 3*inner)
    Q = sa_res[0:bnq, 0:inner]
    K = sa_res[0:bnq, inner:2 * inner]
    V = sa_res[bnq:2 * bnq, 2 * inner:3 * inner]
    attn = _mha(Q, K, V, batch=batch, nq=nq, nk=nq, heads=heads, dim_head=dim_head)
    attn = jnp.dot(attn, sa_wp, preferred_element_type=jnp.float32) + sa_bp
    x1 = _layernorm(queries + attn, ln1_g, ln1_b)

    # ---- cross attention: q = x1 + qpe, k = keys + kpe, v = keys ----------------
    q2 = x1 + qpe
    xk = keys + kpe
    ca_in = jnp.concatenate([q2, xk, keys], axis=0)                     # (bnq+2*bnk, dim)
    ca_res = jnp.dot(ca_in, ca_w, preferred_element_type=jnp.float32)   # (.., 3*inner)
    Q2 = ca_res[0:bnq, 0:inner]
    K2 = ca_res[bnq:bnq + bnk, inner:2 * inner]
    V2 = ca_res[bnq + bnk:bnq + 2 * bnk, 2 * inner:3 * inner]
    attn2 = _mha(Q2, K2, V2, batch=batch, nq=nq, nk=nk, heads=heads, dim_head=dim_head)
    attn2 = jnp.dot(attn2, ca_wp, preferred_element_type=jnp.float32) + ca_bp
    x2 = _layernorm(x1 + attn2, ln2_g, ln2_b)

    # ---- feed forward: Linear -> exact GELU -> Linear (dropout = identity) ------
    h = jnp.dot(x2, ff_w1, preferred_element_type=jnp.float32) + ff_b1
    h = 0.5 * h * (1.0 + _erf(h * (1.0 / math.sqrt(2.0))))
    mlp = jnp.dot(h, ff_w2, preferred_element_type=jnp.float32) + ff_b2
    out = _layernorm(x2 + mlp, ln3_g, ln3_b)

    o_ref[...] = out.astype(o_ref.dtype)      # single slab store
    # Lane-dense output reshaping is irrelevant at (16, 32); revisit for large B*Nq.


# ---------------- pallas_call wrapper -----------------------------------------
@jax.jit
def attention_block_forward(queries, keys, query_pe, key_pe, w_slab, pv_slab):
    Bq, Nq, D = queries.shape
    _, Nk, _ = keys.shape

    # fold batch into the sublane / M dimension (free reshapes)
    q_f = queries.reshape(Bq * Nq, D)
    k_f = keys.reshape(Bq * Nk, D)
    qpe_f = query_pe.reshape(Bq * Nq, D)
    kpe_f = key_pe.reshape(Bq * Nk, D)

    out = pl.pallas_call(
        partial(_attention_block_kernel, batch=Bq, nq=Nq, nk=Nk, dim=D,
                heads=HEADS, dim_head=DIM_HEAD, mlp_dim=MLP_DIM),
        out_shape=jax.ShapeDtypeStruct((Bq * Nq, D), queries.dtype),
        # No grid / no BlockSpecs: single invocation, whole (tiny) operands resident
        # in VMEM, no per-operand double buffering.  For production shapes: grid=(B,)
        # with pltpu.CompilerParams(dimension_semantics=("parallel",)) to use both
        # v7x TensorCores, plus a lane-dense output slab.
    )(q_f, k_f, qpe_f, kpe_f, w_slab, pv_slab)
    return out.reshape(Bq, Nq, D)


# ---------------- parameters ---------------------------------------------------
def init_params(key):
    ks = jax.random.split(key, 20)
    s = 0.02

    def lin(k, din, dout):
        return s * jax.random.normal(k, (din, dout), DTYPE)

    p = {}
    # self attention
    p["sa_wq"] = lin(ks[0], DIM, INNER)
    p["sa_wk"] = lin(ks[1], DIM, INNER)
    p["sa_wv"] = lin(ks[2], DIM, INNER)
    p["sa_wp"] = lin(ks[3], INNER, DIM)
    p["sa_bp"] = s * jax.random.normal(ks[4], (1, DIM), DTYPE)
    # cross attention
    p["ca_wq"] = lin(ks[5], DIM, INNER)
    p["ca_wk"] = lin(ks[6], DIM, INNER)
    p["ca_wv"] = lin(ks[7], DIM, INNER)
    p["ca_wp"] = lin(ks[8], INNER, DIM)
    p["ca_bp"] = s * jax.random.normal(ks[9], (1, DIM), DTYPE)
    # feed forward
    p["ff_w1"] = lin(ks[10], DIM, MLP_DIM)
    p["ff_b1"] = s * jax.random.normal(ks[11], (1, MLP_DIM), DTYPE)
    p["ff_w2"] = lin(ks[12], MLP_DIM, DIM)
    p["ff_b2"] = s * jax.random.normal(ks[13], (1, DIM), DTYPE)
    # layernorms (perturbed so the check actually exercises gamma/beta)
    for i, n in enumerate(("ln1", "ln2", "ln3")):
        p[f"{n}_g"] = 1.0 + s * jax.random.normal(ks[14 + 2 * i], (1, DIM), DTYPE)
        p[f"{n}_b"] = s * jax.random.normal(ks[15 + 2 * i], (1, DIM), DTYPE)
    return p


def pack_params(p):
    """One-time packing of all weights/biases into two DMA-friendly slabs."""
    scale = DIM_HEAD ** (-0.5)

    def pad_w(w):
        return jnp.pad(w, ((0, 0), (0, WSLAB_W - w.shape[1])))

    sa_proj = jnp.concatenate([p["sa_wq"] * scale, p["sa_wk"], p["sa_wv"]], axis=1)
    ca_proj = jnp.concatenate([p["ca_wq"] * scale, p["ca_wk"], p["ca_wv"]], axis=1)
    w_slab = jnp.concatenate(
        [sa_proj, ca_proj, pad_w(p["sa_wp"]), pad_w(p["ca_wp"]),
         pad_w(p["ff_w1"]), pad_w(p["ff_w2"])], axis=0)              # (224, 96)

    def pad_v(v):
        return jnp.pad(v, ((0, 0), (0, MLP_DIM - v.shape[1])))

    pv_slab = jnp.concatenate(
        [pad_v(p["sa_bp"]), pad_v(p["ca_bp"]), p["ff_b1"], pad_v(p["ff_b2"]),
         pad_v(p["ln1_g"]), pad_v(p["ln1_b"]),
         pad_v(p["ln2_g"]), pad_v(p["ln2_b"]),
         pad_v(p["ln3_g"]), pad_v(p["ln3_b"])], axis=0)              # (10, 64)
    return w_slab, pv_slab


# ---------------- pure-JAX reference (for verification) ------------------------
def _ref_attn(q, k, v, wq, wk, wv, wp, bp):
    Q, K, V = q @ wq, k @ wk, v @ wv
    Bq, Nq, _ = Q.shape
    Nk = K.shape[1]
    Qh = Q.reshape(Bq, Nq, HEADS, DIM_HEAD).transpose(0, 2, 1, 3)
    Kh = K.reshape(Bq, Nk, HEADS, DIM_HEAD).transpose(0, 2, 1, 3)
    Vh = V.reshape(Bq, Nk, HEADS, DIM_HEAD).transpose(0, 2, 1, 3)
    s = jnp.einsum("bhqd,bhkd->bhqk", Qh, Kh) * (DIM_HEAD ** -0.5)
    pr = jax.nn.softmax(s, axis=-1)
    o = jnp.einsum("bhqk,bhkd->bhqd", pr, Vh).transpose(0, 2, 1, 3).reshape(Bq, Nq, INNER)
    return o @ wp + bp


def _ref_ln(x, g, b):
    mu = jnp.mean(x, axis=-1, keepdims=True)
    var = jnp.mean((x - mu) ** 2, axis=-1, keepdims=True)
    return (x - mu) * lax.rsqrt(var + EPS) * g + b


def _ref_forward(queries, keys, query_pe, key_pe, p):
    q = queries + query_pe
    queries = _ref_ln(queries + _ref_attn(q, q, queries, p["sa_wq"], p["sa_wk"],
                                          p["sa_wv"], p["sa_wp"], p["sa_bp"]),
                      p["ln1_g"], p["ln1_b"])
    q = queries + query_pe
    k = keys + key_pe
    queries = _ref_ln(queries + _ref_attn(q, k, keys, p["ca_wq"], p["ca_wk"],
                                          p["ca_wv"], p["ca_wp"], p["ca_bp"]),
                      p["ln2_g"], p["ln2_b"])
    h = queries @ p["ff_w1"] + p["ff_b1"]
    h = 0.5 * h * (1.0 + lax.erf(h / math.sqrt(2.0)))
    mlp = h @ p["ff_w2"] + p["ff_b2"]
    return _ref_ln(queries + mlp, p["ln3_g"], p["ln3_b"])


# ---------------- main ----------------------------------------------------------
if __name__ == "__main__":
    key = jax.random.PRNGKey(0)
    k_in, k_par = jax.random.split(key)
    kq, kk, kqpe, kkpe = jax.random.split(k_in, 4)

    queries = jax.random.normal(kq, (B, NQ, DIM), DTYPE)
    keys = jax.random.normal(kk, (B, NK, DIM), DTYPE)
    query_pe = jax.random.normal(kqpe, (B, NQ, DIM), DTYPE)
    key_pe = jax.random.normal(kkpe, (B, NK, DIM), DTYPE)

    params = init_params(k_par)
    w_slab, pv_slab = pack_params(params)

    out = attention_block_forward(queries, keys, query_pe, key_pe, w_slab, pv_slab)
    out = jax.block_until_ready(out)

    ref = _ref_forward(queries, keys, query_pe, key_pe, params)
    assert out.shape == (B, NQ, DIM)
    assert jnp.allclose(out, ref, atol=1e-3, rtol=1e-3), "mismatch vs reference"

    print("KERNEL_OK")
</pallas_src>

<mosaic_0001>
module attributes {stable_mosaic.version = 11 : i64} {
  func.func @_attention_block_kernel(%arg0: memref<16x32xf32, #tpu.memory_space<vmem>>, %arg1: memref<32x32xf32, #tpu.memory_space<vmem>>, %arg2: memref<16x32xf32, #tpu.memory_space<vmem>>, %arg3: memref<32x32xf32, #tpu.memory_space<vmem>>, %arg4: memref<224x96xf32, #tpu.memory_space<vmem>>, %arg5: memref<10x64xf32, #tpu.memory_space<vmem>>, %arg6: memref<16x32xf32, #tpu.memory_space<vmem>>) attributes {dimension_semantics = [], scalar_prefetch = 0 : i64, scratch_operands = 0 : i64, tpu.core_type = #tpu.core_type<tc>} {
    %c0 = arith.constant 0 : index
    %c0_0 = arith.constant 0 : index
    %0 = vector.load %arg0[%c0, %c0_0] : memref<16x32xf32, #tpu.memory_space<vmem>>, vector<16x32xf32>
    %c0_1 = arith.constant 0 : index
    %c0_2 = arith.constant 0 : index
    %1 = vector.load %arg1[%c0_1, %c0_2] : memref<32x32xf32, #tpu.memory_space<vmem>>, vector<32x32xf32>
    %c0_3 = arith.constant 0 : index
    %c0_4 = arith.constant 0 : index
    %2 = vector.load %arg2[%c0_3, %c0_4] : memref<16x32xf32, #tpu.memory_space<vmem>>, vector<16x32xf32>
    %c0_5 = arith.constant 0 : index
    %c0_6 = arith.constant 0 : index
    %3 = vector.load %arg3[%c0_5, %c0_6] : memref<32x32xf32, #tpu.memory_space<vmem>>, vector<32x32xf32>
    %c0_7 = arith.constant 0 : index
    %c0_8 = arith.constant 0 : index
    %4 = vector.load %arg4[%c0_7, %c0_8] : memref<224x96xf32, #tpu.memory_space<vmem>>, vector<32x96xf32>
    %c32 = arith.constant 32 : index
    %c0_9 = arith.constant 0 : index
    %5 = vector.load %arg4[%c32, %c0_9] : memref<224x96xf32, #tpu.memory_space<vmem>>, vector<32x96xf32>
    %c64 = arith.constant 64 : index
    %c0_10 = arith.constant 0 : index
    %6 = vector.load %arg4[%c64, %c0_10] : memref<224x96xf32, #tpu.memory_space<vmem>>, vector<32x32xf32>
    %c96 = arith.constant 96 : index
    %c0_11 = arith.constant 0 : index
    %7 = vector.load %arg4[%c96, %c0_11] : memref<224x96xf32, #tpu.memory_space<vmem>>, vector<32x32xf32>
    %c128 = arith.constant 128 : index
    %c0_12 = arith.constant 0 : index
    %8 = vector.load %arg4[%c128, %c0_12] : memref<224x96xf32, #tpu.memory_space<vmem>>, vector<32x64xf32>
    %c160 = arith.constant 160 : index
    %c0_13 = arith.constant 0 : index
    %9 = vector.load %arg4[%c160, %c0_13] : memref<224x96xf32, #tpu.memory_space<vmem>>, vector<64x32xf32>
    %c0_14 = arith.constant 0 : index
    %c0_15 = arith.constant 0 : index
    %10 = vector.load %arg5[%c0_14, %c0_15] : memref<10x64xf32, #tpu.memory_space<vmem>>, vector<10x64xf32>
    %11 = vector.extract_strided_slice %10 {offsets = [0, 0], sizes = [1, 32], strides = [1, 1]} : vector<10x64xf32> to vector<1x32xf32>
    %12 = vector.extract_strided_slice %10 {offsets = [1, 0], sizes = [1, 32], strides = [1, 1]} : vector<10x64xf32> to vector<1x32xf32>
    %13 = vector.extract_strided_slice %10 {offsets = [2, 0], sizes = [1, 64], strides = [1, 1]} : vector<10x64xf32> to vector<1x64xf32>
    %14 = vector.extract_strided_slice %10 {offsets = [3, 0], sizes = [1, 32], strides = [1, 1]} : vector<10x64xf32> to vector<1x32xf32>
    %15 = vector.extract_strided_slice %10 {offsets = [4, 0], sizes = [1, 32], strides = [1, 1]} : vector<10x64xf32> to vector<1x32xf32>
    %16 = vector.extract_strided_slice %10 {offsets = [5, 0], sizes = [1, 32], strides = [1, 1]} : vector<10x64xf32> to vector<1x32xf32>
    %17 = vector.extract_strided_slice %10 {offsets = [6, 0], sizes = [1, 32], strides = [1, 1]} : vector<10x64xf32> to vector<1x32xf32>
    %18 = vector.extract_strided_slice %10 {offsets = [7, 0], sizes = [1, 32], strides = [1, 1]} : vector<10x64xf32> to vector<1x32xf32>
    %19 = vector.extract_strided_slice %10 {offsets = [8, 0], sizes = [1, 32], strides = [1, 1]} : vector<10x64xf32> to vector<1x32xf32>
    %20 = vector.extract_strided_slice %10 {offsets = [9, 0], sizes = [1, 32], strides = [1, 1]} : vector<10x64xf32> to vector<1x32xf32>
    %21 = arith.addf %0, %2 : vector<16x32xf32>
    %22 = tpu.concatenate %21, %0 in 0 : vector<16x32xf32>, vector<16x32xf32> -> vector<32x32xf32>
    %cst = arith.constant dense<0.000000e+00> : vector<32x96xf32>
    %23 = tpu.matmul %22, %4, %cst {dimension_numbers = #tpu.dot_dimension_numbers<[1], [0], [0], [1], [0, 0, 1, 1], [], []>} : vector<32x32xf32>, vector<32x96xf32>, vector<32x96xf32> -> vector<32x96xf32>
    %24 = vector.extract_strided_slice %23 {offsets = [0, 0], sizes = [16, 32], strides = [1, 1]} : vector<32x96xf32> to vector<16x32xf32>
    %25 = vector.extract_strided_slice %23 {offsets = [0, 32], sizes = [16, 32], strides = [1, 1]} : vector<32x96xf32> to vector<16x32xf32>
    %26 = vector.extract_strided_slice %23 {offsets = [16, 64], sizes = [16, 32], strides = [1, 1]} : vector<32x96xf32> to vector<16x32xf32>
    %27 = tpu.iota {dimensions = array<i32: 0>} : vector<64x32xi32>
    %28 = tpu.iota {dimensions = array<i32: 1>} : vector<64x32xi32>
    %c0_i32 = arith.constant 0 : i32
    %29 = vector.broadcast %c0_i32 : i32 to vector<64x32xi32>
    %c0_i32_16 = arith.constant 0 : i32
    %30 = vector.broadcast %c0_i32_16 : i32 to vector<64x32xi32>
    %c16_i32 = arith.constant 16 : i32
    %31 = vector.broadcast %c16_i32 : i32 to vector<64x32xi32>
    %32 = arith.cmpi sge, %27, %31 : vector<64x32xi32>
    %33 = arith.extui %32 : vector<64x32xi1> to vector<64x32xi32>
    %34 = arith.addi %29, %33 : vector<64x32xi32>
    %c8_i32 = arith.constant 8 : i32
    %35 = vector.broadcast %c8_i32 : i32 to vector<64x32xi32>
    %36 = arith.cmpi sge, %28, %35 : vector<64x32xi32>
    %37 = arith.extui %36 : vector<64x32xi1> to vector<64x32xi32>
    %38 = arith.addi %30, %37 : vector<64x32xi32>
    %c32_i32 = arith.constant 32 : i32
    %39 = vector.broadcast %c32_i32 : i32 to vector<64x32xi32>
    %40 = arith.cmpi sge, %27, %39 : vector<64x32xi32>
    %41 = arith.extui %40 : vector<64x32xi1> to vector<64x32xi32>
    %42 = arith.addi %34, %41 : vector<64x32xi32>
    %c16_i32_17 = arith.constant 16 : i32
    %43 = vector.broadcast %c16_i32_17 : i32 to vector<64x32xi32>
    %44 = arith.cmpi sge, %28, %43 : vector<64x32xi32>
    %45 = arith.extui %44 : vector<64x32xi1> to vector<64x32xi32>
    %46 = arith.addi %38, %45 : vector<64x32xi32>
    %c48_i32 = arith.constant 48 : i32
    %47 = vector.broadcast %c48_i32 : i32 to vector<64x32xi32>
    %48 = arith.cmpi sge, %27, %47 : vector<64x32xi32>
    %49 = arith.extui %48 : vector<64x32xi1> to vector<64x32xi32>
    %50 = arith.addi %42, %49 : vector<64x32xi32>
    %c24_i32 = arith.constant 24 : i32
    %51 = vector.broadcast %c24_i32 : i32 to vector<64x32xi32>
    %52 = arith.cmpi sge, %28, %51 : vector<64x32xi32>
    %53 = arith.extui %52 : vector<64x32xi1> to vector<64x32xi32>
    %54 = arith.addi %46, %53 : vector<64x32xi32>
    %55 = arith.cmpi eq, %50, %54 : vector<64x32xi32>
    %56 = arith.extui %55 : vector<64x32xi1> to vector<64x32xi32>
    %57 = arith.sitofp %56 : vector<64x32xi32> to vector<64x32xf32>
    %58 = tpu.iota {dimensions = array<i32: 0>} : vector<64x16xi32>
    %59 = tpu.iota {dimensions = array<i32: 1>} : vector<64x16xi32>
    %false = arith.constant false
    %60 = vector.broadcast %false : i1 to vector<64x16xi1>
    %c0_i32_18 = arith.constant 0 : i32
    %61 = vector.broadcast %c0_i32_18 : i32 to vector<64x16xi32>
    %62 = arith.cmpi sge, %58, %61 : vector<64x16xi32>
    %c8_i32_19 = arith.constant 8 : i32
    %63 = vector.broadcast %c8_i32_19 : i32 to vector<64x16xi32>
    %64 = arith.cmpi slt, %58, %63 : vector<64x16xi32>
    %65 = arith.andi %62, %64 : vector<64x16xi1>
    %c0_i32_20 = arith.constant 0 : i32
    %66 = vector.broadcast %c0_i32_20 : i32 to vector<64x16xi32>
    %67 = arith.cmpi sge, %59, %66 : vector<64x16xi32>
    %c8_i32_21 = arith.constant 8 : i32
    %68 = vector.broadcast %c8_i32_21 : i32 to vector<64x16xi32>
    %69 = arith.cmpi slt, %59, %68 : vector<64x16xi32>
    %70 = arith.andi %67, %69 : vector<64x16xi1>
    %71 = arith.andi %65, %70 : vector<64x16xi1>
    %72 = arith.ori %60, %71 : vector<64x16xi1>
    %c8_i32_22 = arith.constant 8 : i32
    %73 = vector.broadcast %c8_i32_22 : i32 to vector<64x16xi32>
    %74 = arith.cmpi sge, %58, %73 : vector<64x16xi32>
    %c16_i32_23 = arith.constant 16 : i32
    %75 = vector.broadcast %c16_i32_23 : i32 to vector<64x16xi32>
    %76 = arith.cmpi slt, %58, %75 : vector<64x16xi32>
    %77 = arith.andi %74, %76 : vector<64x16xi1>
    %c8_i32_24 = arith.constant 8 : i32
    %78 = vector.broadcast %c8_i32_24 : i32 to vector<64x16xi32>
    %79 = arith.cmpi sge, %59, %78 : vector<64x16xi32>
    %c16_i32_25 = arith.constant 16 : i32
    %80 = vector.broadcast %c16_i32_25 : i32 to vector<64x16xi32>
    %81 = arith.cmpi slt, %59, %80 : vector<64x16xi32>
    %82 = arith.andi %79, %81 : vector<64x16xi1>
    %83 = arith.andi %77, %82 : vector<64x16xi1>
    %84 = arith.ori %72, %83 : vector<64x16xi1>
    %c16_i32_26 = arith.constant 16 : i32
    %85 = vector.broadcast %c16_i32_26 : i32 to vector<64x16xi32>
    %86 = arith.cmpi sge, %58, %85 : vector<64x16xi32>
    %c24_i32_27 = arith.constant 24 : i32
    %87 = vector.broadcast %c24_i32_27 : i32 to vector<64x16xi32>
    %88 = arith.cmpi slt, %58, %87 : vector<64x16xi32>
    %89 = arith.andi %86, %88 : vector<64x16xi1>
    %c0_i32_28 = arith.constant 0 : i32
    %90 = vector.broadcast %c0_i32_28 : i32 to vector<64x16xi32>
    %91 = arith.cmpi sge, %59, %90 : vector<64x16xi32>
    %c8_i32_29 = arith.constant 8 : i32
    %92 = vector.broadcast %c8_i32_29 : i32 to vector<64x16xi32>
    %93 = arith.cmpi slt, %59, %92 : vector<64x16xi32>
    %94 = arith.andi %91, %93 : vector<64x16xi1>
    %95 = arith.andi %89, %94 : vector<64x16xi1>
    %96 = arith.ori %84, %95 : vector<64x16xi1>
    %c24_i32_30 = arith.constant 24 : i32
    %97 = vector.broadcast %c24_i32_30 : i32 to vector<64x16xi32>
    %98 = arith.cmpi sge, %58, %97 : vector<64x16xi32>
    %c32_i32_31 = arith.constant 32 : i32
    %99 = vector.broadcast %c32_i32_31 : i32 to vector<64x16xi32>
    %100 = arith.cmpi slt, %58, %99 : vector<64x16xi32>
    %101 = arith.andi %98, %100 : vector<64x16xi1>
    %c8_i32_32 = arith.constant 8 : i32
    %102 = vector.broadcast %c8_i32_32 : i32 to vector<64x16xi32>
    %103 = arith.cmpi sge, %59, %102 : vector<64x16xi32>
    %c16_i32_33 = arith.constant 16 : i32
    %104 = vector.broadcast %c16_i32_33 : i32 to vector<64x16xi32>
    %105 = arith.cmpi slt, %59, %104 : vector<64x16xi32>
    %106 = arith.andi %103, %105 : vector<64x16xi1>
    %107 = arith.andi %101, %106 : vector<64x16xi1>
    %108 = arith.ori %96, %107 : vector<64x16xi1>
    %c32_i32_34 = arith.constant 32 : i32
    %109 = vector.broadcast %c32_i32_34 : i32 to vector<64x16xi32>
    %110 = arith.cmpi sge, %58, %109 : vector<64x16xi32>
    %c40_i32 = arith.constant 40 : i32
    %111 = vector.broadcast %c40_i32 : i32 to vector<64x16xi32>
    %112 = arith.cmpi slt, %58, %111 : vector<64x16xi32>
    %113 = arith.andi %110, %112 : vector<64x16xi1>
    %c0_i32_35 = arith.constant 0 : i32
    %114 = vector.broadcast %c0_i32_35 : i32 to vector<64x16xi32>
    %115 = arith.cmpi sge, %59, %114 : vector<64x16xi32>
    %c8_i32_36 = arith.constant 8 : i32
    %116 = vector.broadcast %c8_i32_36 : i32 to vector<64x16xi32>
    %117 = arith.cmpi slt, %59, %116 : vector<64x16xi32>
    %118 = arith.andi %115, %117 : vector<64x16xi1>
    %119 = arith.andi %113, %118 : vector<64x16xi1>
    %120 = arith.ori %108, %119 : vector<64x16xi1>
    %c40_i32_37 = arith.constant 40 : i32
    %121 = vector.broadcast %c40_i32_37 : i32 to vector<64x16xi32>
    %122 = arith.cmpi sge, %58, %121 : vector<64x16xi32>
    %c48_i32_38 = arith.constant 48 : i32
    %123 = vector.broadcast %c48_i32_38 : i32 to vector<64x16xi32>
    %124 = arith.cmpi slt, %58, %123 : vector<64x16xi32>
    %125 = arith.andi %122, %124 : vector<64x16xi1>
    %c8_i32_39 = arith.constant 8 : i32
    %126 = vector.broadcast %c8_i32_39 : i32 to vector<64x16xi32>
    %127 = arith.cmpi sge, %59, %126 : vector<64x16xi32>
    %c16_i32_40 = arith.constant 16 : i32
    %128 = vector.broadcast %c16_i32_40 : i32 to vector<64x16xi32>
    %129 = arith.cmpi slt, %59, %128 : vector<64x16xi32>
    %130 = arith.andi %127, %129 : vector<64x16xi1>
    %131 = arith.andi %125, %130 : vector<64x16xi1>
    %132 = arith.ori %120, %131 : vector<64x16xi1>
    %c48_i32_41 = arith.constant 48 : i32
    %133 = vector.broadcast %c48_i32_41 : i32 to vector<64x16xi32>
    %134 = arith.cmpi sge, %58, %133 : vector<64x16xi32>
    %c56_i32 = arith.constant 56 : i32
    %135 = vector.broadcast %c56_i32 : i32 to vector<64x16xi32>
    %136 = arith.cmpi slt, %58, %135 : vector<64x16xi32>
    %137 = arith.andi %134, %136 : vector<64x16xi1>
    %c0_i32_42 = arith.constant 0 : i32
    %138 = vector.broadcast %c0_i32_42 : i32 to vector<64x16xi32>
    %139 = arith.cmpi sge, %59, %138 : vector<64x16xi32>
    %c8_i32_43 = arith.constant 8 : i32
    %140 = vector.broadcast %c8_i32_43 : i32 to vector<64x16xi32>
    %141 = arith.cmpi slt, %59, %140 : vector<64x16xi32>
    %142 = arith.andi %139, %141 : vector<64x16xi1>
    %143 = arith.andi %137, %142 : vector<64x16xi1>
    %144 = arith.ori %132, %143 : vector<64x16xi1>
    %c56_i32_44 = arith.constant 56 : i32
    %145 = vector.broadcast %c56_i32_44 : i32 to vector<64x16xi32>
    %146 = arith.cmpi sge, %58, %145 : vector<64x16xi32>
    %c64_i32 = arith.constant 64 : i32
    %147 = vector.broadcast %c64_i32 : i32 to vector<64x16xi32>
    %148 = arith.cmpi slt, %58, %147 : vector<64x16xi32>
    %149 = arith.andi %146, %148 : vector<64x16xi1>
    %c8_i32_45 = arith.constant 8 : i32
    %150 = vector.broadcast %c8_i32_45 : i32 to vector<64x16xi32>
    %151 = arith.cmpi sge, %59, %150 : vector<64x16xi32>
    %c16_i32_46 = arith.constant 16 : i32
    %152 = vector.broadcast %c16_i32_46 : i32 to vector<64x16xi32>
    %153 = arith.cmpi slt, %59, %152 : vector<64x16xi32>
    %154 = arith.andi %151, %153 : vector<64x16xi1>
    %155 = arith.andi %149, %154 : vector<64x16xi1>
    %156 = arith.ori %144, %155 : vector<64x16xi1>
    %cst_47 = arith.constant 0.000000e+00 : f32
    %cst_48 = arith.constant -1.000000e+30 : f32
    %157 = vector.broadcast %cst_47 : f32 to vector<64x16xf32>
    %158 = vector.broadcast %cst_48 : f32 to vector<64x16xf32>
    %159 = arith.select %156, %157, %158 : vector<64x16xi1>, vector<64x16xf32>
    %160 = vector.shape_cast %24 : vector<16x32xf32> to vector<1x16x32xf32>
    %161 = vector.shape_cast %160 : vector<1x16x32xf32> to vector<1x16x32xf32>
    %162 = vector.broadcast %161 : vector<1x16x32xf32> to vector<4x16x32xf32>
    %163 = vector.shape_cast %162 : vector<4x16x32xf32> to vector<64x32xf32>
    %164 = arith.mulf %163, %57 : vector<64x32xf32>
    %cst_49 = arith.constant dense<0.000000e+00> : vector<64x16xf32>
    %165 = tpu.matmul %164, %25, %cst_49 {dimension_numbers = #tpu.dot_dimension_numbers<[1], [1], [0], [0], [0, 0, 1, 0], [], []>} : vector<64x32xf32>, vector<16x32xf32>, vector<64x16xf32> -> vector<64x16xf32>
    %166 = arith.addf %165, %159 : vector<64x16xf32>
    %cst_50 = arith.constant dense<0xFF800000> : vector<64xf32>
    %167 = vector.multi_reduction <maximumf>, %166, %cst_50 [1] : vector<64x16xf32> to vector<64xf32>
    %168 = vector.shape_cast %167 : vector<64xf32> to vector<64x1xf32>
    %169 = vector.broadcast %168 : vector<64x1xf32> to vector<64x16xf32>
    %170 = arith.subf %166, %169 : vector<64x16xf32>
    %171 = math.exp %170 : vector<64x16xf32>
    %cst_51 = arith.constant dense<0.000000e+00> : vector<64xf32>
    %172 = vector.multi_reduction <add>, %171, %cst_51 [1] : vector<64x16xf32> to vector<64xf32>
    %173 = vector.shape_cast %172 : vector<64xf32> to vector<64x1xf32>
    %174 = vector.broadcast %173 : vector<64x1xf32> to vector<64x16xf32>
    %175 = arith.divf %171, %174 : vector<64x16xf32>
    %cst_52 = arith.constant dense<0.000000e+00> : vector<64x32xf32>
    %176 = tpu.matmul %175, %26, %cst_52 {dimension_numbers = #tpu.dot_dimension_numbers<[1], [0], [0], [1], [0, 0, 1, 1], [], []>} : vector<64x16xf32>, vector<16x32xf32>, vector<64x32xf32> -> vector<64x32xf32>
    %177 = arith.mulf %176, %57 : vector<64x32xf32>
    %178 = vector.extract_strided_slice %177 {offsets = [0, 0], sizes = [16, 32], strides = [1, 1]} : vector<64x32xf32> to vector<16x32xf32>
    %179 = vector.extract_strided_slice %177 {offsets = [16, 0], sizes = [16, 32], strides = [1, 1]} : vector<64x32xf32> to vector<16x32xf32>
    %180 = arith.addf %178, %179 : vector<16x32xf32>
    %181 = vector.extract_strided_slice %177 {offsets = [32, 0], sizes = [16, 32], strides = [1, 1]} : vector<64x32xf32> to vector<16x32xf32>
    %182 = arith.addf %180, %181 : vector<16x32xf32>
    %183 = vector.extract_strided_slice %177 {offsets = [48, 0], sizes = [16, 32], strides = [1, 1]} : vector<64x32xf32> to vector<16x32xf32>
    %184 = arith.addf %182, %183 : vector<16x32xf32>
    %cst_53 = arith.constant dense<0.000000e+00> : vector<16x32xf32>
    %185 = tpu.matmul %184, %6, %cst_53 {dimension_numbers = #tpu.dot_dimension_numbers<[1], [0], [0], [1], [0, 0, 1, 1], [], []>} : vector<16x32xf32>, vector<32x32xf32>, vector<16x32xf32> -> vector<16x32xf32>
    %186 = vector.broadcast %11 : vector<1x32xf32> to vector<16x32xf32>
    %187 = arith.addf %185, %186 : vector<16x32xf32>
    %188 = arith.addf %0, %187 : vector<16x32xf32>
    %cst_54 = arith.constant dense<0.000000e+00> : vector<16xf32>
    %189 = vector.multi_reduction <add>, %188, %cst_54 [1] : vector<16x32xf32> to vector<16xf32>
    %190 = vector.shape_cast %189 : vector<16xf32> to vector<16x1xf32>
    %cst_55 = arith.constant 3.200000e+01 : f32
    %191 = vector.broadcast %cst_55 : f32 to vector<16x1xf32>
    %192 = arith.divf %190, %191 : vector<16x1xf32>
    %193 = vector.broadcast %192 : vector<16x1xf32> to vector<16x32xf32>
    %194 = arith.subf %188, %193 : vector<16x32xf32>
    %195 = arith.mulf %194, %194 : vector<16x32xf32>
    %cst_56 = arith.constant dense<0.000000e+00> : vector<16xf32>
    %196 = vector.multi_reduction <add>, %195, %cst_56 [1] : vector<16x32xf32> to vector<16xf32>
    %197 = vector.shape_cast %196 : vector<16xf32> to vector<16x1xf32>
    %cst_57 = arith.constant 3.200000e+01 : f32
    %198 = vector.broadcast %cst_57 : f32 to vector<16x1xf32>
    %199 = arith.divf %197, %198 : vector<16x1xf32>
    %200 = vector.broadcast %192 : vector<16x1xf32> to vector<16x32xf32>
    %201 = arith.subf %188, %200 : vector<16x32xf32>
    %cst_58 = arith.constant 9.99999974E-6 : f32
    %202 = vector.broadcast %cst_58 : f32 to vector<16x1xf32>
    %203 = arith.addf %199, %202 : vector<16x1xf32>
    %204 = math.rsqrt %203 : vector<16x1xf32>
    %205 = vector.broadcast %204 : vector<16x1xf32> to vector<16x32xf32>
    %206 = arith.mulf %201, %205 : vector<16x32xf32>
    %207 = vector.broadcast %15 : vector<1x32xf32> to vector<16x32xf32>
    %208 = arith.mulf %206, %207 : vector<16x32xf32>
    %209 = vector.broadcast %16 : vector<1x32xf32> to vector<16x32xf32>
    %210 = arith.addf %208, %209 : vector<16x32xf32>
    %211 = arith.addf %210, %2 : vector<16x32xf32>
    %212 = arith.addf %1, %3 : vector<32x32xf32>
    %213 = tpu.concatenate %211, %212, %1 in 0 : vector<16x32xf32>, vector<32x32xf32>, vector<32x32xf32> -> vector<80x32xf32>
    %cst_59 = arith.constant dense<0.000000e+00> : vector<80x96xf32>
    %214 = tpu.matmul %213, %5, %cst_59 {dimension_numbers = #tpu.dot_dimension_numbers<[1], [0], [0], [1], [0, 0, 1, 1], [], []>} : vector<80x32xf32>, vector<32x96xf32>, vector<80x96xf32> -> vector<80x96xf32>
    %215 = vector.extract_strided_slice %214 {offsets = [0, 0], sizes = [16, 32], strides = [1, 1]} : vector<80x96xf32> to vector<16x32xf32>
    %216 = vector.extract_strided_slice %214 {offsets = [16, 32], sizes = [32, 32], strides = [1, 1]} : vector<80x96xf32> to vector<32x32xf32>
    %217 = vector.extract_strided_slice %214 {offsets = [48, 64], sizes = [32, 32], strides = [1, 1]} : vector<80x96xf32> to vector<32x32xf32>
    %218 = tpu.iota {dimensions = array<i32: 0>} : vector<64x32xi32>
    %219 = tpu.iota {dimensions = array<i32: 1>} : vector<64x32xi32>
    %c0_i32_60 = arith.constant 0 : i32
    %220 = vector.broadcast %c0_i32_60 : i32 to vector<64x32xi32>
    %c0_i32_61 = arith.constant 0 : i32
    %221 = vector.broadcast %c0_i32_61 : i32 to vector<64x32xi32>
    %c16_i32_62 = arith.constant 16 : i32
    %222 = vector.broadcast %c16_i32_62 : i32 to vector<64x32xi32>
    %223 = arith.cmpi sge, %218, %222 : vector<64x32xi32>
    %224 = arith.extui %223 : vector<64x32xi1> to vector<64x32xi32>
    %225 = arith.addi %220, %224 : vector<64x32xi32>
    %c8_i32_63 = arith.constant 8 : i32
    %226 = vector.broadcast %c8_i32_63 : i32 to vector<64x32xi32>
    %227 = arith.cmpi sge, %219, %226 : vector<64x32xi32>
    %228 = arith.extui %227 : vector<64x32xi1> to vector<64x32xi32>
    %229 = arith.addi %221, %228 : vector<64x32xi32>
    %c32_i32_64 = arith.constant 32 : i32
    %230 = vector.broadcast %c32_i32_64 : i32 to vector<64x32xi32>
    %231 = arith.cmpi sge, %218, %230 : vector<64x32xi32>
    %232 = arith.extui %231 : vector<64x32xi1> to vector<64x32xi32>
    %233 = arith.addi %225, %232 : vector<64x32xi32>
    %c16_i32_65 = arith.constant 16 : i32
    %234 = vector.broadcast %c16_i32_65 : i32 to vector<64x32xi32>
    %235 = arith.cmpi sge, %219, %234 : vector<64x32xi32>
    %236 = arith.extui %235 : vector<64x32xi1> to vector<64x32xi32>
    %237 = arith.addi %229, %236 : vector<64x32xi32>
    %c48_i32_66 = arith.constant 48 : i32
    %238 = vector.broadcast %c48_i32_66 : i32 to vector<64x32xi32>
    %239 = arith.cmpi sge, %218, %238 : vector<64x32xi32>
    %240 = arith.extui %239 : vector<64x32xi1> to vector<64x32xi32>
    %241 = arith.addi %233, %240 : vector<64x32xi32>
    %c24_i32_67 = arith.constant 24 : i32
    %242 = vector.broadcast %c24_i32_67 : i32 to vector<64x32xi32>
    %243 = arith.cmpi sge, %219, %242 : vector<64x32xi32>
    %244 = arith.extui %243 : vector<64x32xi1> to vector<64x32xi32>
    %245 = arith.addi %237, %244 : vector<64x32xi32>
    %246 = arith.cmpi eq, %241, %245 : vector<64x32xi32>
    %247 = arith.extui %246 : vector<64x32xi1> to vector<64x32xi32>
    %248 = arith.sitofp %247 : vector<64x32xi32> to vector<64x32xf32>
    %249 = tpu.iota {dimensions = array<i32: 0>} : vector<64x32xi32>
    %250 = tpu.iota {dimensions = array<i32: 1>} : vector<64x32xi32>
    %false_68 = arith.constant false
    %251 = vector.broadcast %false_68 : i1 to vector<64x32xi1>
    %c0_i32_69 = arith.constant 0 : i32
    %252 = vector.broadcast %c0_i32_69 : i32 to vector<64x32xi32>
    %253 = arith.cmpi sge, %249, %252 : vector<64x32xi32>
    %c8_i32_70 = arith.constant 8 : i32
    %254 = vector.broadcast %c8_i32_70 : i32 to vector<64x32xi32>
    %255 = arith.cmpi slt, %249, %254 : vector<64x32xi32>
    %256 = arith.andi %253, %255 : vector<64x32xi1>
    %c0_i32_71 = arith.constant 0 : i32
    %257 = vector.broadcast %c0_i32_71 : i32 to vector<64x32xi32>
    %258 = arith.cmpi sge, %250, %257 : vector<64x32xi32>
    %c16_i32_72 = arith.constant 16 : i32
    %259 = vector.broadcast %c16_i32_72 : i32 to vector<64x32xi32>
    %260 = arith.cmpi slt, %250, %259 : vector<64x32xi32>
    %261 = arith.andi %258, %260 : vector<64x32xi1>
    %262 = arith.andi %256, %261 : vector<64x32xi1>
    %263 = arith.ori %251, %262 : vector<64x32xi1>
    %c8_i32_73 = arith.constant 8 : i32
    %264 = vector.broadcast %c8_i32_73 : i32 to vector<64x32xi32>
    %265 = arith.cmpi sge, %249, %264 : vector<64x32xi32>
    %c16_i32_74 = arith.constant 16 : i32
    %266 = vector.broadcast %c16_i32_74 : i32 to vector<64x32xi32>
    %267 = arith.cmpi slt, %249, %266 : vector<64x32xi32>
    %268 = arith.andi %265, %267 : vector<64x32xi1>
    %c16_i32_75 = arith.constant 16 : i32
    %269 = vector.broadcast %c16_i32_75 : i32 to vector<64x32xi32>
    %270 = arith.cmpi sge, %250, %269 : vector<64x32xi32>
    %c32_i32_76 = arith.constant 32 : i32
    %271 = vector.broadcast %c32_i32_76 : i32 to vector<64x32xi32>
    %272 = arith.cmpi slt, %250, %271 : vector<64x32xi32>
    %273 = arith.andi %270, %272 : vector<64x32xi1>
    %274 = arith.andi %268, %273 : vector<64x32xi1>
    %275 = arith.ori %263, %274 : vector<64x32xi1>
    %c16_i32_77 = arith.constant 16 : i32
    %276 = vector.broadcast %c16_i32_77 : i32 to vector<64x32xi32>
    %277 = arith.cmpi sge, %249, %276 : vector<64x32xi32>
    %c24_i32_78 = arith.constant 24 : i32
    %278 = vector.broadcast %c24_i32_78 : i32 to vector<64x32xi32>
    %279 = arith.cmpi slt, %249, %278 : vector<64x32xi32>
    %280 = arith.andi %277, %279 : vector<64x32xi1>
    %c0_i32_79 = arith.constant 0 : i32
    %281 = vector.broadcast %c0_i32_79 : i32 to vector<64x32xi32>
    %282 = arith.cmpi sge, %250, %281 : vector<64x32xi32>
    %c16_i32_80 = arith.constant 16 : i32
    %283 = vector.broadcast %c16_i32_80 : i32 to vector<64x32xi32>
    %284 = arith.cmpi slt, %250, %283 : vector<64x32xi32>
    %285 = arith.andi %282, %284 : vector<64x32xi1>
    %286 = arith.andi %280, %285 : vector<64x32xi1>
    %287 = arith.ori %275, %286 : vector<64x32xi1>
    %c24_i32_81 = arith.constant 24 : i32
    %288 = vector.broadcast %c24_i32_81 : i32 to vector<64x32xi32>
    %289 = arith.cmpi sge, %249, %288 : vector<64x32xi32>
    %c32_i32_82 = arith.constant 32 : i32
    %290 = vector.broadcast %c32_i32_82 : i32 to vector<64x32xi32>
    %291 = arith.cmpi slt, %249, %290 : vector<64x32xi32>
    %292 = arith.andi %289, %291 : vector<64x32xi1>
    %c16_i32_83 = arith.constant 16 : i32
    %293 = vector.broadcast %c16_i32_83 : i32 to vector<64x32xi32>
    %294 = arith.cmpi sge, %250, %293 : vector<64x32xi32>
    %c32_i32_84 = arith.constant 32 : i32
    %295 = vector.broadcast %c32_i32_84 : i32 to vector<64x32xi32>
    %296 = arith.cmpi slt, %250, %295 : vector<64x32xi32>
    %297 = arith.andi %294, %296 : vector<64x32xi1>
    %298 = arith.andi %292, %297 : vector<64x32xi1>
    %299 = arith.ori %287, %298 : vector<64x32xi1>
    %c32_i32_85 = arith.constant 32 : i32
    %300 = vector.broadcast %c32_i32_85 : i32 to vector<64x32xi32>
    %301 = arith.cmpi sge, %249, %300 : vector<64x32xi32>
    %c40_i32_86 = arith.constant 40 : i32
    %302 = vector.broadcast %c40_i32_86 : i32 to vector<64x32xi32>
    %303 = arith.cmpi slt, %249, %302 : vector<64x32xi32>
    %304 = arith.andi %301, %303 : vector<64x32xi1>
    %c0_i32_87 = arith.constant 0 : i32
    %305 = vector.broadcast %c0_i32_87 : i32 to vector<64x32xi32>
    %306 = arith.cmpi sge, %250, %305 : vector<64x32xi32>
    %c16_i32_88 = arith.constant 16 : i32
    %307 = vector.broadcast %c16_i32_88 : i32 to vector<64x32xi32>
    %308 = arith.cmpi slt, %250, %307 : vector<64x32xi32>
    %309 = arith.andi %306, %308 : vector<64x32xi1>
    %310 = arith.andi %304, %309 : vector<64x32xi1>
    %311 = arith.ori %299, %310 : vector<64x32xi1>
    %c40_i32_89 = arith.constant 40 : i32
    %312 = vector.broadcast %c40_i32_89 : i32 to vector<64x32xi32>
    %313 = arith.cmpi sge, %249, %312 : vector<64x32xi32>
    %c48_i32_90 = arith.constant 48 : i32
    %314 = vector.broadcast %c48_i32_90 : i32 to vector<64x32xi32>
    %315 = arith.cmpi slt, %249, %314 : vector<64x32xi32>
    %316 = arith.andi %313, %315 : vector<64x32xi1>
    %c16_i32_91 = arith.constant 16 : i32
    %317 = vector.broadcast %c16_i32_91 : i32 to vector<64x32xi32>
    %318 = arith.cmpi sge, %250, %317 : vector<64x32xi32>
    %c32_i32_92 = arith.constant 32 : i32
    %319 = vector.broadcast %c32_i32_92 : i32 to vector<64x32xi32>
    %320 = arith.cmpi slt, %250, %319 : vector<64x32xi32>
    %321 = arith.andi %318, %320 : vector<64x32xi1>
    %322 = arith.andi %316, %321 : vector<64x32xi1>
    %323 = arith.ori %311, %322 : vector<64x32xi1>
    %c48_i32_93 = arith.constant 48 : i32
    %324 = vector.broadcast %c48_i32_93 : i32 to vector<64x32xi32>
    %325 = arith.cmpi sge, %249, %324 : vector<64x32xi32>
    %c56_i32_94 = arith.constant 56 : i32
    %326 = vector.broadcast %c56_i32_94 : i32 to vector<64x32xi32>
    %327 = arith.cmpi slt, %249, %326 : vector<64x32xi32>
    %328 = arith.andi %325, %327 : vector<64x32xi1>
    %c0_i32_95 = arith.constant 0 : i32
    %329 = vector.broadcast %c0_i32_95 : i32 to vector<64x32xi32>
    %330 = arith.cmpi sge, %250, %329 : vector<64x32xi32>
    %c16_i32_96 = arith.constant 16 : i32
    %331 = vector.broadcast %c16_i32_96 : i32 to vector<64x32xi32>
    %332 = arith.cmpi slt, %250, %331 : vector<64x32xi32>
    %333 = arith.andi %330, %332 : vector<64x32xi1>
    %334 = arith.andi %328, %333 : vector<64x32xi1>
    %335 = arith.ori %323, %334 : vector<64x32xi1>
    %c56_i32_97 = arith.constant 56 : i32
    %336 = vector.broadcast %c56_i32_97 : i32 to vector<64x32xi32>
    %337 = arith.cmpi sge, %249, %336 : vector<64x32xi32>
    %c64_i32_98 = arith.constant 64 : i32
    %338 = vector.broadcast %c64_i32_98 : i32 to vector<64x32xi32>
    %339 = arith.cmpi slt, %249, %338 : vector<64x32xi32>
    %340 = arith.andi %337, %339 : vector<64x32xi1>
    %c16_i32_99 = arith.constant 16 : i32
    %341 = vector.broadcast %c16_i32_99 : i32 to vector<64x32xi32>
    %342 = arith.cmpi sge, %250, %341 : vector<64x32xi32>
    %c32_i32_100 = arith.constant 32 : i32
    %343 = vector.broadcast %c32_i32_100 : i32 to vector<64x32xi32>
    %344 = arith.cmpi slt, %250, %343 : vector<64x32xi32>
    %345 = arith.andi %342, %344 : vector<64x32xi1>
    %346 = arith.andi %340, %345 : vector<64x32xi1>
    %347 = arith.ori %335, %346 : vector<64x32xi1>
    %cst_101 = arith.constant 0.000000e+00 : f32
    %cst_102 = arith.constant -1.000000e+30 : f32
    %348 = vector.broadcast %cst_101 : f32 to vector<64x32xf32>
    %349 = vector.broadcast %cst_102 : f32 to vector<64x32xf32>
    %350 = arith.select %347, %348, %349 : vector<64x32xi1>, vector<64x32xf32>
    %351 = vector.shape_cast %215 : vector<16x32xf32> to vector<1x16x32xf32>
    %352 = vector.shape_cast %351 : vector<1x16x32xf32> to vector<1x16x32xf32>
    %353 = vector.broadcast %352 : vector<1x16x32xf32> to vector<4x16x32xf32>
    %354 = vector.shape_cast %353 : vector<4x16x32xf32> to vector<64x32xf32>
    %355 = arith.mulf %354, %248 : vector<64x32xf32>
    %cst_103 = arith.constant dense<0.000000e+00> : vector<64x32xf32>
    %356 = tpu.matmul %355, %216, %cst_103 {dimension_numbers = #tpu.dot_dimension_numbers<[1], [1], [0], [0], [0, 0, 1, 0], [], []>} : vector<64x32xf32>, vector<32x32xf32>, vector<64x32xf32> -> vector<64x32xf32>
    %357 = arith.addf %356, %350 : vector<64x32xf32>
    %cst_104 = arith.constant dense<0xFF800000> : vector<64xf32>
    %358 = vector.multi_reduction <maximumf>, %357, %cst_104 [1] : vector<64x32xf32> to vector<64xf32>
    %359 = vector.shape_cast %358 : vector<64xf32> to vector<64x1xf32>
    %360 = vector.broadcast %359 : vector<64x1xf32> to vector<64x32xf32>
    %361 = arith.subf %357, %360 : vector<64x32xf32>
    %362 = math.exp %361 : vector<64x32xf32>
    %cst_105 = arith.constant dense<0.000000e+00> : vector<64xf32>
    %363 = vector.multi_reduction <add>, %362, %cst_105 [1] : vector<64x32xf32> to vector<64xf32>
    %364 = vector.shape_cast %363 : vector<64xf32> to vector<64x1xf32>
    %365 = vector.broadcast %364 : vector<64x1xf32> to vector<64x32xf32>
    %366 = arith.divf %362, %365 : vector<64x32xf32>
    %cst_106 = arith.constant dense<0.000000e+00> : vector<64x32xf32>
    %367 = tpu.matmul %366, %217, %cst_106 {dimension_numbers = #tpu.dot_dimension_numbers<[1], [0], [0], [1], [0, 0, 1, 1], [], []>} : vector<64x32xf32>, vector<32x32xf32>, vector<64x32xf32> -> vector<64x32xf32>
    %368 = arith.mulf %367, %248 : vector<64x32xf32>
    %369 = vector.extract_strided_slice %368 {offsets = [0, 0], sizes = [16, 32], strides = [1, 1]} : vector<64x32xf32> to vector<16x32xf32>
    %370 = vector.extract_strided_slice %368 {offsets = [16, 0], sizes = [16, 32], strides = [1, 1]} : vector<64x32xf32> to vector<16x32xf32>
    %371 = arith.addf %369, %370 : vector<16x32xf32>
    %372 = vector.extract_strided_slice %368 {offsets = [32, 0], sizes = [16, 32], strides = [1, 1]} : vector<64x32xf32> to vector<16x32xf32>
    %373 = arith.addf %371, %372 : vector<16x32xf32>
    %374 = vector.extract_strided_slice %368 {offsets = [48, 0], sizes = [16, 32], strides = [1, 1]} : vector<64x32xf32> to vector<16x32xf32>
    %375 = arith.addf %373, %374 : vector<16x32xf32>
    %cst_107 = arith.constant dense<0.000000e+00> : vector<16x32xf32>
    %376 = tpu.matmul %375, %7, %cst_107 {dimension_numbers = #tpu.dot_dimension_numbers<[1], [0], [0], [1], [0, 0, 1, 1], [], []>} : vector<16x32xf32>, vector<32x32xf32>, vector<16x32xf32> -> vector<16x32xf32>
    %377 = vector.broadcast %12 : vector<1x32xf32> to vector<16x32xf32>
    %378 = arith.addf %376, %377 : vector<16x32xf32>
    %379 = arith.addf %210, %378 : vector<16x32xf32>
    %cst_108 = arith.constant dense<0.000000e+00> : vector<16xf32>
    %380 = vector.multi_reduction <add>, %379, %cst_108 [1] : vector<16x32xf32> to vector<16xf32>
    %381 = vector.shape_cast %380 : vector<16xf32> to vector<16x1xf32>
    %cst_109 = arith.constant 3.200000e+01 : f32
    %382 = vector.broadcast %cst_109 : f32 to vector<16x1xf32>
    %383 = arith.divf %381, %382 : vector<16x1xf32>
    %384 = vector.broadcast %383 : vector<16x1xf32> to vector<16x32xf32>
    %385 = arith.subf %379, %384 : vector<16x32xf32>
    %386 = arith.mulf %385, %385 : vector<16x32xf32>
    %cst_110 = arith.constant dense<0.000000e+00> : vector<16xf32>
    %387 = vector.multi_reduction <add>, %386, %cst_110 [1] : vector<16x32xf32> to vector<16xf32>
    %388 = vector.shape_cast %387 : vector<16xf32> to vector<16x1xf32>
    %cst_111 = arith.constant 3.200000e+01 : f32
    %389 = vector.broadcast %cst_111 : f32 to vector<16x1xf32>
    %390 = arith.divf %388, %389 : vector<16x1xf32>
    %391 = vector.broadcast %383 : vector<16x1xf32> to vector<16x32xf32>
    %392 = arith.subf %379, %391 : vector<16x32xf32>
    %cst_112 = arith.constant 9.99999974E-6 : f32
    %393 = vector.broadcast %cst_112 : f32 to vector<16x1xf32>
    %394 = arith.addf %390, %393 : vector<16x1xf32>
    %395 = math.rsqrt %394 : vector<16x1xf32>
    %396 = vector.broadcast %395 : vector<16x1xf32> to vector<16x32xf32>
    %397 = arith.mulf %392, %396 : vector<16x32xf32>
    %398 = vector.broadcast %17 : vector<1x32xf32> to vector<16x32xf32>
    %399 = arith.mulf %397, %398 : vector<16x32xf32>
    %400 = vector.broadcast %18 : vector<1x32xf32> to vector<16x32xf32>
    %401 = arith.addf %399, %400 : vector<16x32xf32>
    %cst_113 = arith.constant dense<0.000000e+00> : vector<16x64xf32>
    %402 = tpu.matmul %401, %8, %cst_113 {dimension_numbers = #tpu.dot_dimension_numbers<[1], [0], [0], [1], [0, 0, 1, 1], [], []>} : vector<16x32xf32>, vector<32x64xf32>, vector<16x64xf32> -> vector<16x64xf32>
    %403 = vector.broadcast %13 : vector<1x64xf32> to vector<16x64xf32>
    %404 = arith.addf %402, %403 : vector<16x64xf32>
    %cst_114 = arith.constant 5.000000e-01 : f32
    %405 = vector.broadcast %cst_114 : f32 to vector<16x64xf32>
    %406 = arith.mulf %405, %404 : vector<16x64xf32>
    %cst_115 = arith.constant 0.707106769 : f32
    %407 = vector.broadcast %cst_115 : f32 to vector<16x64xf32>
    %408 = arith.mulf %404, %407 : vector<16x64xf32>
    %cst_116 = arith.constant 0.000000e+00 : f32
    %409 = vector.broadcast %cst_116 : f32 to vector<16x64xf32>
    %410 = arith.cmpf oge, %408, %409 : vector<16x64xf32>
    %cst_117 = arith.constant 1.000000e+00 : f32
    %cst_118 = arith.constant -1.000000e+00 : f32
    %411 = vector.broadcast %cst_117 : f32 to vector<16x64xf32>
    %412 = vector.broadcast %cst_118 : f32 to vector<16x64xf32>
    %413 = arith.select %410, %411, %412 : vector<16x64xi1>, vector<16x64xf32>
    %414 = math.absf %408 : vector<16x64xf32>
    %cst_119 = arith.constant 0.327591091 : f32
    %415 = vector.broadcast %cst_119 : f32 to vector<16x64xf32>
    %416 = arith.mulf %415, %414 : vector<16x64xf32>
    %cst_120 = arith.constant 1.000000e+00 : f32
    %417 = vector.broadcast %cst_120 : f32 to vector<16x64xf32>
    %418 = arith.addf %417, %416 : vector<16x64xf32>
    %cst_121 = arith.constant 1.000000e+00 : f32
    %419 = vector.broadcast %cst_121 : f32 to vector<16x64xf32>
    %420 = arith.divf %419, %418 : vector<16x64xf32>
    %cst_122 = arith.constant 1.06140542 : f32
    %421 = vector.broadcast %cst_122 : f32 to vector<16x64xf32>
    %422 = arith.mulf %421, %420 : vector<16x64xf32>
    %cst_123 = arith.constant -1.45315206 : f32
    %423 = vector.broadcast %cst_123 : f32 to vector<16x64xf32>
    %424 = arith.addf %422, %423 : vector<16x64xf32>
    %425 = arith.mulf %424, %420 : vector<16x64xf32>
    %cst_124 = arith.constant 1.42141378 : f32
    %426 = vector.broadcast %cst_124 : f32 to vector<16x64xf32>
    %427 = arith.addf %425, %426 : vector<16x64xf32>
    %428 = arith.mulf %427, %420 : vector<16x64xf32>
    %cst_125 = arith.constant -0.284496725 : f32
    %429 = vector.broadcast %cst_125 : f32 to vector<16x64xf32>
    %430 = arith.addf %428, %429 : vector<16x64xf32>
    %431 = arith.mulf %430, %420 : vector<16x64xf32>
    %cst_126 = arith.constant 0.254829586 : f32
    %432 = vector.broadcast %cst_126 : f32 to vector<16x64xf32>
    %433 = arith.addf %431, %432 : vector<16x64xf32>
    %434 = arith.mulf %433, %420 : vector<16x64xf32>
    %cst_127 = arith.constant 0.000000e+00 : f32
    %435 = vector.broadcast %cst_127 : f32 to vector<16x64xf32>
    %436 = arith.subf %435, %414 : vector<16x64xf32>
    %437 = arith.mulf %436, %414 : vector<16x64xf32>
    %438 = math.exp %437 : vector<16x64xf32>
    %439 = arith.mulf %434, %438 : vector<16x64xf32>
    %cst_128 = arith.constant 1.000000e+00 : f32
    %440 = vector.broadcast %cst_128 : f32 to vector<16x64xf32>
    %441 = arith.subf %440, %439 : vector<16x64xf32>
    %442 = arith.mulf %413, %441 : vector<16x64xf32>
    %cst_129 = arith.constant 1.000000e+00 : f32
    %443 = vector.broadcast %cst_129 : f32 to vector<16x64xf32>
    %444 = arith.addf %443, %442 : vector<16x64xf32>
    %445 = arith.mulf %406, %444 : vector<16x64xf32>
    %cst_130 = arith.constant dense<0.000000e+00> : vector<16x32xf32>
    %446 = tpu.matmul %445, %9, %cst_130 {dimension_numbers = #tpu.dot_dimension_numbers<[1], [0], [0], [1], [0, 0, 1, 1], [], []>} : vector<16x64xf32>, vector<64x32xf32>, vector<16x32xf32> -> vector<16x32xf32>
    %447 = vector.broadcast %14 : vector<1x32xf32> to vector<16x32xf32>
    %448 = arith.addf %446, %447 : vector<16x32xf32>
    %449 = arith.addf %401, %448 : vector<16x32xf32>
    %cst_131 = arith.constant dense<0.000000e+00> : vector<16xf32>
    %450 = vector.multi_reduction <add>, %449, %cst_131 [1] : vector<16x32xf32> to vector<16xf32>
    %451 = vector.shape_cast %450 : vector<16xf32> to vector<16x1xf32>
    %cst_132 = arith.constant 3.200000e+01 : f32
    %452 = vector.broadcast %cst_132 : f32 to vector<16x1xf32>
    %453 = arith.divf %451, %452 : vector<16x1xf32>
    %454 = vector.broadcast %453 : vector<16x1xf32> to vector<16x32xf32>
    %455 = arith.subf %449, %454 : vector<16x32xf32>
    %456 = arith.mulf %455, %455 : vector<16x32xf32>
    %cst_133 = arith.constant dense<0.000000e+00> : vector<16xf32>
    %457 = vector.multi_reduction <add>, %456, %cst_133 [1] : vector<16x32xf32> to vector<16xf32>
    %458 = vector.shape_cast %457 : vector<16xf32> to vector<16x1xf32>
    %cst_134 = arith.constant 3.200000e+01 : f32
    %459 = vector.broadcast %cst_134 : f32 to vector<16x1xf32>
    %460 = arith.divf %458, %459 : vector<16x1xf32>
    %461 = vector.broadcast %453 : vector<16x1xf32> to vector<16x32xf32>
    %462 = arith.subf %449, %461 : vector<16x32xf32>
    %cst_135 = arith.constant 9.99999974E-6 : f32
    %463 = vector.broadcast %cst_135 : f32 to vector<16x1xf32>
    %464 = arith.addf %460, %463 : vector<16x1xf32>
    %465 = math.rsqrt %464 : vector<16x1xf32>
    %466 = vector.broadcast %465 : vector<16x1xf32> to vector<16x32xf32>
    %467 = arith.mulf %462, %466 : vector<16x32xf32>
    %468 = vector.broadcast %19 : vector<1x32xf32> to vector<16x32xf32>
    %469 = arith.mulf %467, %468 : vector<16x32xf32>
    %470 = vector.broadcast %20 : vector<1x32xf32> to vector<16x32xf32>
    %471 = arith.addf %469, %470 : vector<16x32xf32>
    %c0_136 = arith.constant 0 : index
    %c0_137 = arith.constant 0 : index
    %472 = vector.load %arg6[%c0_136, %c0_137] : memref<16x32xf32, #tpu.memory_space<vmem>>, vector<16x32xf32>
    tpu.vector_store %arg6[%c0_136, %c0_137], %471 {strides = array<i32>} : memref<16x32xf32, #tpu.memory_space<vmem>>, vector<16x32xf32>,
    return
  }
}

</mosaic_0001>

<llo_original>
// kernel: attention_block_forward.1
$region0: #{attention_block_forward.1}
  #allocation0 [shape = 'u32[]', space=smem, size = 0x4, offset = 0x4, fixed_abs, tag = 'smem constant byte address 0x4 - core index']
  #allocation1 [shape = 'u32[144,128]{1,0:T(1,128)}', space=vmem, size = 0x12000, scoped, tag = 'internal scratch']
  %s0 = inlined_call_operand.vmem [shape: f32[16,32], index: 0, kind: input, shape index: {}]
  %s1 = inlined_call_operand.vmem [shape: f32[32,32], index: 1, kind: input, shape index: {}]
  %s2 = inlined_call_operand.vmem [shape: f32[16,32], index: 2, kind: input, shape index: {}]
  %s3 = inlined_call_operand.vmem [shape: f32[32,32], index: 3, kind: input, shape index: {}]
  %s4 = inlined_call_operand.vmem [shape: f32[224,96], index: 4, kind: input, shape index: {}]
  %s5 = inlined_call_operand.vmem [shape: f32[10,64], index: 5, kind: input, shape index: {}]
  %s6 = inlined_call_operand.hbm [shape: f32[16,32], index: 6, kind: output, shape index: {}]
  %s7 = sld [smem:[#allocation0]]
  $region34: #{attention_block_forward.1} parent=0
    _
  %s9 = ssub.s32 1, %s7
  %s10 = scalar_select 0, %s9, %s7
  $region1: #{attention_block_forward.1} parent=0
    #allocation2 [shape = 'u8[8192]{0}', space=vmem, size = 0x2000, scoped, tag = 'output window, operand 0, single buffered']
    #allocation3 [shape = 's32[1]{0}', space=sflag, size = 0x4, scoped, tag = 'scoped memory for attention_block_forward.1']
    %11 = vsyncpa [#allocation3], 0
    // Predicated region
    $region2: #{attention_block_forward.1} parent=1 // pred_check
      _
    $region3: #{attention_block_forward.1} parent=1 // pred_check_branch
      %13 = sbr.rel (0) target = $region5
    $region4: #{attention_block_forward.1} parent=1 // pred_region
      _
    $region5: #{attention_block_forward.1} parent=1 // pred_fallthru
      _
    // Predicated region
    $region6: #{attention_block_forward.1} parent=1 // pred_check
      _
    $region7: #{attention_block_forward.1} parent=1 // pred_check_branch
      %15 = sbr.rel (0) target = $region9
    $region8: #{attention_block_forward.1} parent=1 // pred_region
      _
    $region9: #{attention_block_forward.1} parent=1 // pred_fallthru
      _
    // Predicated region
    $region10: #{attention_block_forward.1} parent=1 // pred_check
      _
    $region11: #{attention_block_forward.1} parent=1 // pred_check_branch
      %17 = sbr.rel (0) target = $region13
    $region12: #{attention_block_forward.1} parent=1 // pred_region
      _
    $region13: #{attention_block_forward.1} parent=1 // pred_fallthru
      _
    // Predicated region
    $region14: #{attention_block_forward.1} parent=1 // pred_check
      _
    $region15: #{attention_block_forward.1} parent=1 // pred_check_branch
      %19 = sbr.rel (0) target = $region17
    $region16: #{attention_block_forward.1} parent=1 // pred_region
      _
    $region17: #{attention_block_forward.1} parent=1 // pred_fallthru
      _
    // Predicated region
    $region18: #{attention_block_forward.1} parent=1 // pred_check
      _
    $region19: #{attention_block_forward.1} parent=1 // pred_check_branch
      %21 = sbr.rel (0) target = $region21
    $region20: #{attention_block_forward.1} parent=1 // pred_region
      _
    $region21: #{attention_block_forward.1} parent=1 // pred_fallthru
      _
    // Predicated region
    $region22: #{attention_block_forward.1} parent=1 // pred_check
      _
    $region23: #{attention_block_forward.1} parent=1 // pred_check_branch
      %23 = sbr.rel (0) target = $region25
    $region24: #{attention_block_forward.1} parent=1 // pred_region
      _
    $region25: #{attention_block_forward.1} parent=1 // pred_fallthru
      _
    %v24 = vld [vmem:[%s0] sm:$0xff]
    %v25 = vld [vmem:[%s0 + $0x8] sm:$0xff]
    %v26 = vld [vmem:[%s1] sm:$0xff]
    %v27 = vld [vmem:[%s1 + $0x8] sm:$0xff]
    %v28 = vld [vmem:[%s1 + $0x10] sm:$0xff]
    %v29 = vld [vmem:[%s1 + $0x18] sm:$0xff]
    %v30 = vld [vmem:[%s2] sm:$0xff]
    %v31 = vld [vmem:[%s2 + $0x8] sm:$0xff]
    %v32 = vld [vmem:[%s3] sm:$0xff]
    %v33 = vld [vmem:[%s3 + $0x8] sm:$0xff]
    %v34 = vld [vmem:[%s3 + $0x10] sm:$0xff]
    %v35 = vld [vmem:[%s3 + $0x18] sm:$0xff]
    %v36 = vld [vmem:[%s4] sm:$0xff]
    %v37 = vld [vmem:[%s4 + $0x8] sm:$0xff]
    %v38 = vld [vmem:[%s4 + $0x10] sm:$0xff]
    %v39 = vld [vmem:[%s4 + $0x18] sm:$0xff]
    %v40 = vld [vmem:[%s4 + $0x20] sm:$0xff]
    %v41 = vld [vmem:[%s4 + $0x28] sm:$0xff]
    %v42 = vld [vmem:[%s4 + $0x30] sm:$0xff]
    %v43 = vld [vmem:[%s4 + $0x38] sm:$0xff]
    %v44 = vld [vmem:[%s4 + $0x40] sm:$0xff]
    %v45 = vld [vmem:[%s4 + $0x48] sm:$0xff]
    %v46 = vld [vmem:[%s4 + $0x50] sm:$0xff]
    %v47 = vld [vmem:[%s4 + $0x58] sm:$0xff]
    %v48 = vld [vmem:[%s4 + $0x60] sm:$0xff]
    %v49 = vld [vmem:[%s4 + $0x68] sm:$0xff]
    %v50 = vld [vmem:[%s4 + $0x70] sm:$0xff]
    %v51 = vld [vmem:[%s4 + $0x78] sm:$0xff]
    %v52 = vld [vmem:[%s4 + $0x80] sm:$0xff]
    %v53 = vld [vmem:[%s4 + $0x88] sm:$0xff]
    %v54 = vld [vmem:[%s4 + $0x90] sm:$0xff]
    %v55 = vld [vmem:[%s4 + $0x98] sm:$0xff]
    %v56 = vld [vmem:[%s4 + $0xa0] sm:$0xff]
    %v57 = vld [vmem:[%s4 + $0xa8] sm:$0xff]
    %v58 = vld [vmem:[%s4 + $0xb0] sm:$0xff]
    %v59 = vld [vmem:[%s4 + $0xb8] sm:$0xff]
    %v60 = vld [vmem:[%s4 + $0xc0] sm:$0xff]
    %v61 = vld [vmem:[%s4 + $0xc8] sm:$0xff]
    %v62 = vld [vmem:[%s4 + $0xd0] sm:$0xff]
    %v63 = vld [vmem:[%s4 + $0xd8] sm:$0xff]
    %v64 = vld [vmem:[%s5] sm:$0xff]
    %v65 = vld [vmem:[%s5 + $0x8] sm:$0x3]
    %v66 = vadd.f32 %v24, %v30
    %v67 = vadd.f32 %v25, %v31
    %vm68 = vcmask 261120
    %v70 = vsel %vm68, %v66, 0
    %v73 = vsel %vm68, %v67, 0
    %v76 = vsel %vm68, %v24, 0
    %v79 = vsel %vm68, %v25, 0
    %81 = vmatprep.subr.mxu0 0.0
    %82 = vmatpush1.msra.mxu0 0.0
    %83 = vmatprep.subr.mxu0 0.0
    %84 = vmatpush1.msra.mxu0 0.0
    %85 = vmatprep.subr.mxu0 0.0
    %86 = vmatpush1.msra.mxu0 0.0
    %87 = vmatprep.subr.mxu0 0.0
    %88 = vmatpush1.msra.mxu0 0.0
    %89 = vmatprep.subr.mxu0 0.0
    %90 = vmatpush1.msra.mxu0 0.0
    %91 = vmatprep.subr.mxu0 0.0
    %92 = vmatpush1.msra.mxu0 0.0
    %93 = vmatprep.subr.mxu0 0.0
    %94 = vmatpush1.msra.mxu0 0.0
    %95 = vmatprep.subr.mxu0 0.0
    %96 = vmatpush1.msra.mxu0 0.0
    %97 = vmatprep.subr.mxu0 0.0
    %98 = vmatpush1.msra.mxu0 0.0
    %99 = vmatprep.subr.mxu0 0.0
    %100 = vmatpush1.msra.mxu0 0.0
    %101 = vmatprep.subr.mxu0 0.0
    %102 = vmatpush1.msra.mxu0 0.0
    %103 = vmatprep.subr.mxu0 0.0
    %104 = vmatpush1.msra.mxu0 0.0
    %105 = vmatprep.subr.mxu0 0.0
    %106 = vmatpush1.msra.mxu0 %v39
    %107 = vmatprep.subr.mxu0 0.0
    %108 = vmatpush1.msra.mxu0 %v38
    %109 = vmatprep.subr.mxu0 0.0
    %110 = vmatpush1.msra.mxu0 %v37
    %111 = vmatprep.subr.mxu0 0.0
    %112 = vmatpush1.msra.mxu0 %v36
    %113 = vmatprep.subr.mxu0 0.0
    %114 = vmatpush2.msra.mxu0 0.0
    %115 = vmatprep.subr.mxu0 0.0
    %116 = vmatpush2.msra.mxu0 0.0
    %117 = vmatprep.subr.mxu0 0.0
    %118 = vmatpush2.msra.mxu0 0.0
    %119 = vmatprep.subr.mxu0 0.0
    %120 = vmatpush2.msra.mxu0 0.0
    %121 = vmatprep.subr.mxu0 0.0
    %122 = vmatpush2.msra.mxu0 0.0
    %123 = vmatprep.subr.mxu0 0.0
    %124 = vmatpush2.msra.mxu0 0.0
    %125 = vmatprep.subr.mxu0 0.0
    %126 = vmatpush2.msra.mxu0 0.0
    %127 = vmatprep.subr.mxu0 0.0
    %128 = vmatpush2.msra.mxu0 0.0
    %129 = vmatprep.subr.mxu0 0.0
    %130 = vmatpush2.msra.mxu0 0.0
    %131 = vmatprep.subr.mxu0 0.0
    %132 = vmatpush2.msra.mxu0 0.0
    %133 = vmatprep.subr.mxu0 0.0
    %134 = vmatpush2.msra.mxu0 0.0
    %135 = vmatprep.subr.mxu0 0.0
    %136 = vmatpush2.msra.mxu0 0.0
    %137 = vmatprep.subr.mxu0 0.0
    %138 = vmatpush2.msra.mxu0 0.0
    %139 = vmatprep.subr.mxu0 0.0
    %140 = vmatpush2.msra.mxu0 0.0
    %141 = vmatprep.subr.mxu0 0.0
    %142 = vmatpush2.msra.mxu0 0.0
    %143 = vmatprep.subr.mxu0 0.0
    %144 = vmatpush2.msra.mxu0 0.0
    %145 = vmatprep.mubr.f32.mxu0 0.0
    %146 = vmatmul.mubr.f32.gmra.mxu0 %v70
    %v147 = vpop.f32.mrf.mxu0
    %v148 = vadd.f32 0.0, %v147
    %v149 = vpop.f32.mrf.mxu0
    %150 = vmatprep.mubr.f32.mxu0 0.0
    %151 = vmatmul.mubr.f32.gmra.mxu0 %v73
    %v152 = vpop.f32.mrf.mxu0
    %v153 = vadd.f32 0.0, %v152
    %v154 = vpop.f32.mrf.mxu0
    %155 = vmatprep.mubr.f32.mxu0 0.0
    %156 = vmatmul.mubr.f32.gmra.mxu0 %v76
    %v157 = vpop.f32.mrf.mxu0
    %v158 = vadd.f32 0.0, %v157
    %v159 = vpop.f32.mrf.mxu0
    %160 = vmatprep.mubr.f32.mxu0 0.0
    %161 = vmatmul.mubr.f32.gmra.mxu0 %v79
    %v162 = vpop.f32.mrf.mxu0
    %v163 = vadd.f32 0.0, %v162
    %v164 = vpop.f32.mrf.mxu0
    %165 = vdwg.mxu0
    %v166 = vlaneseq
    %v167 = vshrl.u32 %v166, 7
    %v168 = vadd.s32 %v167, 8
    %v169 = vadd.s32 %v167, 16
    %v170 = vadd.s32 %v167, 24
    %v171 = vadd.s32 %v167, 32
    %v172 = vadd.s32 %v167, 40
    %v173 = vadd.s32 %v167, 48
    %v174 = vadd.s32 %v167, 56
    %v175 = vlaneseq
    %v176 = vand.u32 %v175, 127
    %vm177 = vcmp.ge.s32.totalorder %v167, 16
    %vm178 = vcmp.ge.s32.totalorder %v168, 16
    %vm179 = vcmp.ge.s32.totalorder %v169, 16
    %vm180 = vcmp.ge.s32.totalorder %v170, 16
    %vm181 = vcmp.ge.s32.totalorder %v171, 16
    %vm182 = vcmp.ge.s32.totalorder %v172, 16
    %vm183 = vcmp.ge.s32.totalorder %v173, 16
    %vm184 = vcmp.ge.s32.totalorder %v174, 16
    %v185 = vsel %vm177, 1, 0
    %v186 = vsel %vm178, 1, 0
    %v187 = vsel %vm179, 1, 0
    %v188 = vsel %vm180, 1, 0
    %v189 = vsel %vm181, 1, 0
    %v190 = vsel %vm182, 1, 0
    %v191 = vsel %vm183, 1, 0
    %v192 = vsel %vm184, 1, 0
    %vm193 = vcmp.ge.s32.totalorder %v176, 8
    %v194 = vsel %vm193, 1, 0
    %vm195 = vcmp.ge.s32.totalorder %v167, 32
    %vm196 = vcmp.ge.s32.totalorder %v168, 32
    %vm197 = vcmp.ge.s32.totalorder %v169, 32
    %vm198 = vcmp.ge.s32.totalorder %v170, 32
    %vm199 = vcmp.ge.s32.totalorder %v171, 32
    %vm200 = vcmp.ge.s32.totalorder %v172, 32
    %vm201 = vcmp.ge.s32.totalorder %v173, 32
    %vm202 = vcmp.ge.s32.totalorder %v174, 32
    %v203 = vsel %vm195, 1, 0
    %v204 = vsel %vm196, 1, 0
    %v205 = vsel %vm197, 1, 0
    %v206 = vsel %vm198, 1, 0
    %v207 = vsel %vm199, 1, 0
    %v208 = vsel %vm200, 1, 0
    %v209 = vsel %vm201, 1, 0
    %v210 = vsel %vm202, 1, 0
    %v211 = vadd.s32 %v185, %v203
    %v212 = vadd.s32 %v186, %v204
    %v213 = vadd.s32 %v187, %v205
    %v214 = vadd.s32 %v188, %v206
    %v215 = vadd.s32 %v189, %v207
    %v216 = vadd.s32 %v190, %v208
    %v217 = vadd.s32 %v191, %v209
    %v218 = vadd.s32 %v192, %v210
    %vm219 = vcmp.ge.s32.totalorder %v176, 16
    %v220 = vsel %vm219, 1, 0
    %v221 = vadd.s32 %v194, %v220
    %vm222 = vcmp.ge.s32.totalorder %v167, 48
    %vm223 = vcmp.ge.s32.totalorder %v168, 48
    %vm224 = vcmp.ge.s32.totalorder %v169, 48
    %vm225 = vcmp.ge.s32.totalorder %v170, 48
    %vm226 = vcmp.ge.s32.totalorder %v171, 48
    %vm227 = vcmp.ge.s32.totalorder %v172, 48
    %vm228 = vcmp.ge.s32.totalorder %v173, 48
    %vm229 = vcmp.ge.s32.totalorder %v174, 48
    %v230 = vsel %vm222, 1, 0
    %v231 = vsel %vm223, 1, 0
    %v232 = vsel %vm224, 1, 0
    %v233 = vsel %vm225, 1, 0
    %v234 = vsel %vm226, 1, 0
    %v235 = vsel %vm227, 1, 0
    %v236 = vsel %vm228, 1, 0
    %v237 = vsel %vm229, 1, 0
    %v238 = vadd.s32 %v211, %v230
    %v239 = vadd.s32 %v212, %v231
    %v240 = vadd.s32 %v213, %v232
    %v241 = vadd.s32 %v214, %v233
    %v242 = vadd.s32 %v215, %v234
    %v243 = vadd.s32 %v216, %v235
    %v244 = vadd.s32 %v217, %v236
    %v245 = vadd.s32 %v218, %v237
    %vm246 = vcmp.ge.s32.totalorder %v176, 24
    %v247 = vsel %vm246, 1, 0
    %v248 = vadd.s32 %v221, %v247
    %vm249 = vcmp.eq.s32.totalorder %v238, %v248
    %vm250 = vcmp.eq.s32.totalorder %v239, %v248
    %vm251 = vcmp.eq.s32.totalorder %v240, %v248
    %vm252 = vcmp.eq.s32.totalorder %v241, %v248
    %vm253 = vcmp.eq.s32.totalorder %v242, %v248
    %vm254 = vcmp.eq.s32.totalorder %v243, %v248
    %vm255 = vcmp.eq.s32.totalorder %v244, %v248
    %vm256 = vcmp.eq.s32.totalorder %v245, %v248
    %v257 = vsel %vm249, 1, 0
    %v258 = vsel %vm250, 1, 0
    %v259 = vsel %vm251, 1, 0
    %v260 = vsel %vm252, 1, 0
    %v261 = vsel %vm253, 1, 0
    %v262 = vsel %vm254, 1, 0
    %v263 = vsel %vm255, 1, 0
    %v264 = vsel %vm256, 1, 0
    %v265 = vcvt.s32.f32 %v257
    %v266 = vcvt.s32.f32 %v258
    %v267 = vcvt.s32.f32 %v259
    %v268 = vcvt.s32.f32 %v260
    %v269 = vcvt.s32.f32 %v261
    %v270 = vcvt.s32.f32 %v262
    %v271 = vcvt.s32.f32 %v263
    %v272 = vcvt.s32.f32 %v264
    %vm273 = vcmp.ge.s32.totalorder %v167, 0
    %vm274 = vcmp.ge.s32.totalorder %v168, 0
    %vm275 = vcmp.ge.s32.totalorder %v169, 0
    %vm276 = vcmp.ge.s32.totalorder %v170, 0
    %vm277 = vcmp.ge.s32.totalorder %v171, 0
    %vm278 = vcmp.ge.s32.totalorder %v172, 0
    %vm279 = vcmp.ge.s32.totalorder %v173, 0
    %vm280 = vcmp.ge.s32.totalorder %v174, 0
    %vm281 = vcmp.lt.s32.totalorder %v167, 8
    %vm282 = vcmp.lt.s32.totalorder %v168, 8
    %vm283 = vcmp.lt.s32.totalorder %v169, 8
    %vm284 = vcmp.lt.s32.totalorder %v170, 8
    %vm285 = vcmp.lt.s32.totalorder %v171, 8
    %vm286 = vcmp.lt.s32.totalorder %v172, 8
    %vm287 = vcmp.lt.s32.totalorder %v173, 8
    %vm288 = vcmp.lt.s32.totalorder %v174, 8
    %vm289 = vmand %vm273, %vm281
    %vm290 = vmand %vm274, %vm282
    %vm291 = vmand %vm275, %vm283
    %vm292 = vmand %vm276, %vm284
    %vm293 = vmand %vm277, %vm285
    %vm294 = vmand %vm278, %vm286
    %vm295 = vmand %vm279, %vm287
    %vm296 = vmand %vm280, %vm288
    %vm297 = vcmp.ge.s32.totalorder %v176, 0
    %vm298 = vcmp.lt.s32.totalorder %v176, 8
    %vm299 = vmand %vm297, %vm298
    %vm300 = vmand %vm289, %vm299
    %vm301 = vmand %vm290, %vm299
    %vm302 = vmand %vm291, %vm299
    %vm303 = vmand %vm292, %vm299
    %vm304 = vmand %vm293, %vm299
    %vm305 = vmand %vm294, %vm299
    %vm306 = vmand %vm295, %vm299
    %vm307 = vmand %vm296, %vm299
    %vm308 = vcmp.ge.s32.totalorder %v167, 8
    %vm309 = vcmp.ge.s32.totalorder %v168, 8
    %vm310 = vcmp.ge.s32.totalorder %v169, 8
    %vm311 = vcmp.ge.s32.totalorder %v170, 8
    %vm312 = vcmp.ge.s32.totalorder %v171, 8
    %vm313 = vcmp.ge.s32.totalorder %v172, 8
    %vm314 = vcmp.ge.s32.totalorder %v173, 8
    %vm315 = vcmp.ge.s32.totalorder %v174, 8
    %vm316 = vcmp.lt.s32.totalorder %v167, 16
    %vm317 = vcmp.lt.s32.totalorder %v168, 16
    %vm318 = vcmp.lt.s32.totalorder %v169, 16
    %vm319 = vcmp.lt.s32.totalorder %v170, 16
    %vm320 = vcmp.lt.s32.totalorder %v171, 16
    %vm321 = vcmp.lt.s32.totalorder %v172, 16
    %vm322 = vcmp.lt.s32.totalorder %v173, 16
    %vm323 = vcmp.lt.s32.totalorder %v174, 16
    %vm324 = vmand %vm308, %vm316
    %vm325 = vmand %vm309, %vm317
    %vm326 = vmand %vm310, %vm318
    %vm327 = vmand %vm311, %vm319
    %vm328 = vmand %vm312, %vm320
    %vm329 = vmand %vm313, %vm321
    %vm330 = vmand %vm314, %vm322
    %vm331 = vmand %vm315, %vm323
    %vm332 = vcmp.lt.s32.totalorder %v176, 16
    %vm333 = vmand %vm193, %vm332
    %vm334 = vmand %vm324, %vm333
    %vm335 = vmand %vm325, %vm333
    %vm336 = vmand %vm326, %vm333
    %vm337 = vmand %vm327, %vm333
    %vm338 = vmand %vm328, %vm333
    %vm339 = vmand %vm329, %vm333
    %vm340 = vmand %vm330, %vm333
    %vm341 = vmand %vm331, %vm333
    %vm342 = vmor %vm300, %vm334
    %vm343 = vmor %vm301, %vm335
    %vm344 = vmor %vm302, %vm336
    %vm345 = vmor %vm303, %vm337
    %vm346 = vmor %vm304, %vm338
    %vm347 = vmor %vm305, %vm339
    %vm348 = vmor %vm306, %vm340
    %vm349 = vmor %vm307, %vm341
    %vm350 = vcmp.lt.s32.totalorder %v167, 24
    %vm351 = vcmp.lt.s32.totalorder %v168, 24
    %vm352 = vcmp.lt.s32.totalorder %v169, 24
    %vm353 = vcmp.lt.s32.totalorder %v170, 24
    %vm354 = vcmp.lt.s32.totalorder %v171, 24
    %vm355 = vcmp.lt.s32.totalorder %v172, 24
    %vm356 = vcmp.lt.s32.totalorder %v173, 24
    %vm357 = vcmp.lt.s32.totalorder %v174, 24
    %vm358 = vmand %vm177, %vm350
    %vm359 = vmand %vm178, %vm351
    %vm360 = vmand %vm179, %vm352
    %vm361 = vmand %vm180, %vm353
    %vm362 = vmand %vm181, %vm354
    %vm363 = vmand %vm182, %vm355
    %vm364 = vmand %vm183, %vm356
    %vm365 = vmand %vm184, %vm357
    %vm366 = vmand %vm358, %vm299
    %vm367 = vmand %vm359, %vm299
    %vm368 = vmand %vm360, %vm299
    %vm369 = vmand %vm361, %vm299
    %vm370 = vmand %vm362, %vm299
    %vm371 = vmand %vm363, %vm299
    %vm372 = vmand %vm364, %vm299
    %vm373 = vmand %vm365, %vm299
    %vm374 = vmor %vm342, %vm366
    %vm375 = vmor %vm343, %vm367
    %vm376 = vmor %vm344, %vm368
    %vm377 = vmor %vm345, %vm369
    %vm378 = vmor %vm346, %vm370
    %vm379 = vmor %vm347, %vm371
    %vm380 = vmor %vm348, %vm372
    %vm381 = vmor %vm349, %vm373
    %vm382 = vcmp.ge.s32.totalorder %v167, 24
    %vm383 = vcmp.ge.s32.totalorder %v168, 24
    %vm384 = vcmp.ge.s32.totalorder %v169, 24
    %vm385 = vcmp.ge.s32.totalorder %v170, 24
    %vm386 = vcmp.ge.s32.totalorder %v171, 24
    %vm387 = vcmp.ge.s32.totalorder %v172, 24
    %vm388 = vcmp.ge.s32.totalorder %v173, 24
    %vm389 = vcmp.ge.s32.totalorder %v174, 24
    %vm390 = vcmp.lt.s32.totalorder %v167, 32
    %vm391 = vcmp.lt.s32.totalorder %v168, 32
    %vm392 = vcmp.lt.s32.totalorder %v169, 32
    %vm393 = vcmp.lt.s32.totalorder %v170, 32
    %vm394 = vcmp.lt.s32.totalorder %v171, 32
    %vm395 = vcmp.lt.s32.totalorder %v172, 32
    %vm396 = vcmp.lt.s32.totalorder %v173, 32
    %vm397 = vcmp.lt.s32.totalorder %v174, 32
    %vm398 = vmand %vm382, %vm390
    %vm399 = vmand %vm383, %vm391
    %vm400 = vmand %vm384, %vm392
    %vm401 = vmand %vm385, %vm393
    %vm402 = vmand %vm386, %vm394
    %vm403 = vmand %vm387, %vm395
    %vm404 = vmand %vm388, %vm396
    %vm405 = vmand %vm389, %vm397
    %vm406 = vmand %vm398, %vm333
    %vm407 = vmand %vm399, %vm333
    %vm408 = vmand %vm400, %vm333
    %vm409 = vmand %vm401, %vm333
    %vm410 = vmand %vm402, %vm333
    %vm411 = vmand %vm403, %vm333
    %vm412 = vmand %vm404, %vm333
    %vm413 = vmand %vm405, %vm333
    %vm414 = vmor %vm374, %vm406
    %vm415 = vmor %vm375, %vm407
    %vm416 = vmor %vm376, %vm408
    %vm417 = vmor %vm377, %vm409
    %vm418 = vmor %vm378, %vm410
    %vm419 = vmor %vm379, %vm411
    %vm420 = vmor %vm380, %vm412
    %vm421 = vmor %vm381, %vm413
    %vm422 = vcmp.lt.s32.totalorder %v167, 40
    %vm423 = vcmp.lt.s32.totalorder %v168, 40
    %vm424 = vcmp.lt.s32.totalorder %v169, 40
    %vm425 = vcmp.lt.s32.totalorder %v170, 40
    %vm426 = vcmp.lt.s32.totalorder %v171, 40
    %vm427 = vcmp.lt.s32.totalorder %v172, 40
    %vm428 = vcmp.lt.s32.totalorder %v173, 40
    %vm429 = vcmp.lt.s32.totalorder %v174, 40
    %vm430 = vmand %vm195, %vm422
    %vm431 = vmand %vm196, %vm423
    %vm432 = vmand %vm197, %vm424
    %vm433 = vmand %vm198, %vm425
    %vm434 = vmand %vm199, %vm426
    %vm435 = vmand %vm200, %vm427
    %vm436 = vmand %vm201, %vm428
    %vm437 = vmand %vm202, %vm429
    %vm438 = vmand %vm430, %vm299
    %vm439 = vmand %vm431, %vm299
    %vm440 = vmand %vm432, %vm299
    %vm441 = vmand %vm433, %vm299
    %vm442 = vmand %vm434, %vm299
    %vm443 = vmand %vm435, %vm299
    %vm444 = vmand %vm436, %vm299
    %vm445 = vmand %vm437, %vm299
    %vm446 = vmor %vm414, %vm438
    %vm447 = vmor %vm415, %vm439
    %vm448 = vmor %vm416, %vm440
    %vm449 = vmor %vm417, %vm441
    %vm450 = vmor %vm418, %vm442
    %vm451 = vmor %vm419, %vm443
    %vm452 = vmor %vm420, %vm444
    %vm453 = vmor %vm421, %vm445
    %vm454 = vcmp.ge.s32.totalorder %v167, 40
    %vm455 = vcmp.ge.s32.totalorder %v168, 40
    %vm456 = vcmp.ge.s32.totalorder %v169, 40
    %vm457 = vcmp.ge.s32.totalorder %v170, 40
    %vm458 = vcmp.ge.s32.totalorder %v171, 40
    %vm459 = vcmp.ge.s32.totalorder %v172, 40
    %vm460 = vcmp.ge.s32.totalorder %v173, 40
    %vm461 = vcmp.ge.s32.totalorder %v174, 40
    %vm462 = vcmp.lt.s32.totalorder %v167, 48
    %vm463 = vcmp.lt.s32.totalorder %v168, 48
    %vm464 = vcmp.lt.s32.totalorder %v169, 48
    %vm465 = vcmp.lt.s32.totalorder %v170, 48
    %vm466 = vcmp.lt.s32.totalorder %v171, 48
    %vm467 = vcmp.lt.s32.totalorder %v172, 48
    %vm468 = vcmp.lt.s32.totalorder %v173, 48
    %vm469 = vcmp.lt.s32.totalorder %v174, 48
    %vm470 = vmand %vm454, %vm462
    %vm471 = vmand %vm455, %vm463
    %vm472 = vmand %vm456, %vm464
    %vm473 = vmand %vm457, %vm465
    %vm474 = vmand %vm458, %vm466
    %vm475 = vmand %vm459, %vm467
    %vm476 = vmand %vm460, %vm468
    %vm477 = vmand %vm461, %vm469
    %vm478 = vmand %vm470, %vm333
    %vm479 = vmand %vm471, %vm333
    %vm480 = vmand %vm472, %vm333
    %vm481 = vmand %vm473, %vm333
    %vm482 = vmand %vm474, %vm333
    %vm483 = vmand %vm475, %vm333
    %vm484 = vmand %vm476, %vm333
    %vm485 = vmand %vm477, %vm333
    %vm486 = vmor %vm446, %vm478
    %vm487 = vmor %vm447, %vm479
    %vm488 = vmor %vm448, %vm480
    %vm489 = vmor %vm449, %vm481
    %vm490 = vmor %vm450, %vm482
    %vm491 = vmor %vm451, %vm483
    %vm492 = vmor %vm452, %vm484
    %vm493 = vmor %vm453, %vm485
    %vm494 = vcmp.lt.s32.totalorder %v167, 56
    %vm495 = vcmp.lt.s32.totalorder %v168, 56
    %vm496 = vcmp.lt.s32.totalorder %v169, 56
    %vm497 = vcmp.lt.s32.totalorder %v170, 56
    %vm498 = vcmp.lt.s32.totalorder %v171, 56
    %vm499 = vcmp.lt.s32.totalorder %v172, 56
    %vm500 = vcmp.lt.s32.totalorder %v173, 56
    %vm501 = vcmp.lt.s32.totalorder %v174, 56
    %vm502 = vmand %vm222, %vm494
    %vm503 = vmand %vm223, %vm495
    %vm504 = vmand %vm224, %vm496
    %vm505 = vmand %vm225, %vm497
    %vm506 = vmand %vm226, %vm498
    %vm507 = vmand %vm227, %vm499
    %vm508 = vmand %vm228, %vm500
    %vm509 = vmand %vm229, %vm501
    %vm510 = vmand %vm502, %vm299
    %vm511 = vmand %vm503, %vm299
    %vm512 = vmand %vm504, %vm299
    %vm513 = vmand %vm505, %vm299
    %vm514 = vmand %vm506, %vm299
    %vm515 = vmand %vm507, %vm299
    %vm516 = vmand %vm508, %vm299
    %vm517 = vmand %vm509, %vm299
    %vm518 = vmor %vm486, %vm510
    %vm519 = vmor %vm487, %vm511
    %vm520 = vmor %vm488, %vm512
    %vm521 = vmor %vm489, %vm513
    %vm522 = vmor %vm490, %vm514
    %vm523 = vmor %vm491, %vm515
    %vm524 = vmor %vm492, %vm516
    %vm525 = vmor %vm493, %vm517
    %vm526 = vcmp.ge.s32.totalorder %v167, 56
    %vm527 = vcmp.ge.s32.totalorder %v168, 56
    %vm528 = vcmp.ge.s32.totalorder %v169, 56
    %vm529 = vcmp.ge.s32.totalorder %v170, 56
    %vm530 = vcmp.ge.s32.totalorder %v171, 56
    %vm531 = vcmp.ge.s32.totalorder %v172, 56
    %vm532 = vcmp.ge.s32.totalorder %v173, 56
    %vm533 = vcmp.ge.s32.totalorder %v174, 56
    %vm534 = vcmp.lt.s32.totalorder %v167, 64
    %vm535 = vcmp.lt.s32.totalorder %v168, 64
    %vm536 = vcmp.lt.s32.totalorder %v169, 64
    %vm537 = vcmp.lt.s32.totalorder %v170, 64
    %vm538 = vcmp.lt.s32.totalorder %v171, 64
    %vm539 = vcmp.lt.s32.totalorder %v172, 64
    %vm540 = vcmp.lt.s32.totalorder %v173, 64
    %vm541 = vcmp.lt.s32.totalorder %v174, 64
    %vm542 = vmand %vm526, %vm534
    %vm543 = vmand %vm527, %vm535
    %vm544 = vmand %vm528, %vm536
    %vm545 = vmand %vm529, %vm537
    %vm546 = vmand %vm530, %vm538
    %vm547 = vmand %vm531, %vm539
    %vm548 = vmand %vm532, %vm540
    %vm549 = vmand %vm533, %vm541
    %vm550 = vmand %vm542, %vm333
    %vm551 = vmand %vm543, %vm333
    %vm552 = vmand %vm544, %vm333
    %vm553 = vmand %vm545, %vm333
    %vm554 = vmand %vm546, %vm333
    %vm555 = vmand %vm547, %vm333
    %vm556 = vmand %vm548, %vm333
    %vm557 = vmand %vm549, %vm333
    %vm558 = vmor %vm518, %vm550
    %vm559 = vmor %vm519, %vm551
    %vm560 = vmor %vm520, %vm552
    %vm561 = vmor %vm521, %vm553
    %vm562 = vmor %vm522, %vm554
    %vm563 = vmor %vm523, %vm555
    %vm564 = vmor %vm524, %vm556
    %vm565 = vmor %vm525, %vm557
    %v566 = vsel %vm558, 0.0, -1e+30
    %v567 = vsel %vm559, 0.0, -1e+30
    %v568 = vsel %vm560, 0.0, -1e+30
    %v569 = vsel %vm561, 0.0, -1e+30
    %v570 = vsel %vm562, 0.0, -1e+30
    %v571 = vsel %vm563, 0.0, -1e+30
    %v572 = vsel %vm564, 0.0, -1e+30
    %v573 = vsel %vm565, 0.0, -1e+30
    %v574 = vmul.f32 %v148, %v265
    %v575 = vmul.f32 %v153, %v266
    %v576 = vmul.f32 %v148, %v267
    %v577 = vmul.f32 %v153, %v268
    %v578 = vmul.f32 %v148, %v269
    %v579 = vmul.f32 %v153, %v270
    %v580 = vmul.f32 %v148, %v271
    %v581 = vmul.f32 %v153, %v272
    %584 = vrot.lane.b32.xlu0 %v148, 96
    %v585 = vpop.permute.xlu0 %584
    %586 = vrot.lane.b32.xlu0 %v153, 96
    %v587 = vpop.permute.xlu0 %586
    %v589 = vsel %vm68, %v574, 0
    %v592 = vsel %vm68, %v575, 0
    %v595 = vsel %vm68, %v576, 0
    %v598 = vsel %vm68, %v577, 0
    %v601 = vsel %vm68, %v578, 0
    %v604 = vsel %vm68, %v579, 0
    %v607 = vsel %vm68, %v580, 0
    %v610 = vsel %vm68, %v581, 0
    %v612 = vsel %vm68, %v585, 0
    %v614 = vsel %vm68, %v587, 0
    %616 = vmatprep.subr.mxu0 0.0
    %617 = vmatpush1.xpose.msra.mxu0 0.0
    %618 = vmatprep.subr.mxu0 0.0
    %619 = vmatpush1.xpose.msra.mxu0 0.0
    %620 = vmatprep.subr.mxu0 0.0
    %621 = vmatpush1.xpose.msra.mxu0 0.0
    %622 = vmatprep.subr.mxu0 0.0
    %623 = vmatpush1.xpose.msra.mxu0 0.0
    %624 = vmatprep.subr.mxu0 0.0
    %625 = vmatpush1.xpose.msra.mxu0 0.0
    %626 = vmatprep.subr.mxu0 0.0
    %627 = vmatpush1.xpose.msra.mxu0 0.0
    %628 = vmatprep.subr.mxu0 0.0
    %629 = vmatpush1.xpose.msra.mxu0 0.0
    %630 = vmatprep.subr.mxu0 0.0
    %631 = vmatpush1.xpose.msra.mxu0 0.0
    %632 = vmatprep.subr.mxu0 0.0
    %633 = vmatpush1.xpose.msra.mxu0 0.0
    %634 = vmatprep.subr.mxu0 0.0
    %635 = vmatpush1.xpose.msra.mxu0 0.0
    %636 = vmatprep.subr.mxu0 0.0
    %637 = vmatpush1.xpose.msra.mxu0 0.0
    %638 = vmatprep.subr.mxu0 0.0
    %639 = vmatpush1.xpose.msra.mxu0 0.0
    %640 = vmatprep.subr.mxu0 0.0
    %641 = vmatpush1.xpose.msra.mxu0 0.0
    %642 = vmatprep.subr.mxu0 0.0
    %643 = vmatpush1.xpose.msra.mxu0 0.0
    %644 = vmatprep.subr.mxu0 0.0
    %645 = vmatpush1.xpose.msra.mxu0 %v614
    %646 = vmatprep.subr.mxu0 0.0
    %647 = vmatpush1.xpose.msra.mxu0 %v612
    %648 = vmatprep.subr.mxu0 0.0
    %649 = vmatpush2.xpose.msra.mxu0 0.0
    %650 = vmatprep.subr.mxu0 0.0
    %651 = vmatpush2.xpose.msra.mxu0 0.0
    %652 = vmatprep.subr.mxu0 0.0
    %653 = vmatpush2.xpose.msra.mxu0 0.0
    %654 = vmatprep.subr.mxu0 0.0
    %655 = vmatpush2.xpose.msra.mxu0 0.0
    %656 = vmatprep.subr.mxu0 0.0
    %657 = vmatpush2.xpose.msra.mxu0 0.0
    %658 = vmatprep.subr.mxu0 0.0
    %659 = vmatpush2.xpose.msra.mxu0 0.0
    %660 = vmatprep.subr.mxu0 0.0
    %661 = vmatpush2.xpose.msra.mxu0 0.0
    %662 = vmatprep.subr.mxu0 0.0
    %663 = vmatpush2.xpose.msra.mxu0 0.0
    %664 = vmatprep.subr.mxu0 0.0
    %665 = vmatpush2.xpose.msra.mxu0 0.0
    %666 = vmatprep.subr.mxu0 0.0
    %667 = vmatpush2.xpose.msra.mxu0 0.0
    %668 = vmatprep.subr.mxu0 0.0
    %669 = vmatpush2.xpose.msra.mxu0 0.0
    %670 = vmatprep.subr.mxu0 0.0
    %671 = vmatpush2.xpose.msra.mxu0 0.0
    %672 = vmatprep.subr.mxu0 0.0
    %673 = vmatpush2.xpose.msra.mxu0 0.0
    %674 = vmatprep.subr.mxu0 0.0
    %675 = vmatpush2.xpose.msra.mxu0 0.0
    %676 = vmatprep.subr.mxu0 0.0
    %677 = vmatpush2.xpose.msra.mxu0 0.0
    %678 = vmatprep.subr.mxu0 0.0
    %679 = vmatpush2.xpose.msra.mxu0 0.0
    %680 = vmatprep.mubr.f32.mxu0 0.0
    %681 = vmatmul.mubr.f32.gmra.mxu0 %v589
    %v682 = vpop.f32.mrf.mxu0
    %v683 = vadd.f32 %v566, %v682
    %v684 = vpop.f32.mrf.mxu0
    %685 = vmatprep.mubr.f32.mxu0 0.0
    %686 = vmatmul.mubr.f32.gmra.mxu0 %v592
    %v687 = vpop.f32.mrf.mxu0
    %v688 = vadd.f32 %v567, %v687
    %v689 = vpop.f32.mrf.mxu0
    %690 = vmatprep.mubr.f32.mxu0 0.0
    %691 = vmatmul.mubr.f32.gmra.mxu0 %v595
    %v692 = vpop.f32.mrf.mxu0
    %v693 = vadd.f32 %v568, %v692
    %v694 = vpop.f32.mrf.mxu0
    %695 = vmatprep.mubr.f32.mxu0 0.0
    %696 = vmatmul.mubr.f32.gmra.mxu0 %v598
    %v697 = vpop.f32.mrf.mxu0
    %v698 = vadd.f32 %v569, %v697
    %v699 = vpop.f32.mrf.mxu0
    %700 = vmatprep.mubr.f32.mxu0 0.0
    %701 = vmatmul.mubr.f32.gmra.mxu0 %v601
    %v702 = vpop.f32.mrf.mxu0
    %v703 = vadd.f32 %v570, %v702
    %v704 = vpop.f32.mrf.mxu0
    %705 = vmatprep.mubr.f32.mxu0 0.0
    %706 = vmatmul.mubr.f32.gmra.mxu0 %v604
    %v707 = vpop.f32.mrf.mxu0
    %v708 = vadd.f32 %v571, %v707
    %v709 = vpop.f32.mrf.mxu0
    %710 = vmatprep.mubr.f32.mxu0 0.0
    %711 = vmatmul.mubr.f32.gmra.mxu0 %v607
    %v712 = vpop.f32.mrf.mxu0
    %v713 = vadd.f32 %v572, %v712
    %v714 = vpop.f32.mrf.mxu0
    %715 = vmatprep.mubr.f32.mxu0 0.0
    %716 = vmatmul.mubr.f32.gmra.mxu0 %v610
    %v717 = vpop.f32.mrf.mxu0
    %v718 = vadd.f32 %v573, %v717
    %v719 = vpop.f32.mrf.mxu0
    %720 = vdwg.mxu0
    %vm721 = vcmask 130048
    %v722 = vsel %vm721, %v683, -inf
    %723 = vmax.xlane.f32.xlu0 %v722
    %v724 = vpop.xlane.xlu0 %723
    %v725 = vsel %vm721, %v688, -inf
    %726 = vmax.xlane.f32.xlu0 %v725
    %v727 = vpop.xlane.xlu0 %726
    %v728 = vsel %vm721, %v693, -inf
    %729 = vmax.xlane.f32.xlu0 %v728
    %v730 = vpop.xlane.xlu0 %729
    %v731 = vsel %vm721, %v698, -inf
    %732 = vmax.xlane.f32.xlu0 %v731
    %v733 = vpop.xlane.xlu0 %732
    %v734 = vsel %vm721, %v703, -inf
    %735 = vmax.xlane.f32.xlu0 %v734
    %v736 = vpop.xlane.xlu0 %735
    %v737 = vsel %vm721, %v708, -inf
    %738 = vmax.xlane.f32.xlu0 %v737
    %v739 = vpop.xlane.xlu0 %738
    %v740 = vsel %vm721, %v713, -inf
    %741 = vmax.xlane.f32.xlu0 %v740
    %v742 = vpop.xlane.xlu0 %741
    %v743 = vsel %vm721, %v718, -inf
    %744 = vmax.xlane.f32.xlu0 %v743
    %v745 = vpop.xlane.xlu0 %744
    %v746 = vsub.f32 %v683, %v724
    %v747 = vsub.f32 %v688, %v727
    %v748 = vsub.f32 %v693, %v730
    %v749 = vsub.f32 %v698, %v733
    %v750 = vsub.f32 %v703, %v736
    %v751 = vsub.f32 %v708, %v739
    %v752 = vsub.f32 %v713, %v742
    %v753 = vsub.f32 %v718, %v745
    %v754 = vmul.f32 %v746, 1.442695
    %v755 = vpow.pop %v754
    %v756 = vmul.f32 %v747, 1.442695
    %v757 = vpow.pop %v756
    %v758 = vmul.f32 %v748, 1.442695
    %v759 = vpow.pop %v758
    %v760 = vmul.f32 %v749, 1.442695
    %v761 = vpow.pop %v760
    %v762 = vmul.f32 %v750, 1.442695
    %v763 = vpow.pop %v762
    %v764 = vmul.f32 %v751, 1.442695
    %v765 = vpow.pop %v764
    %v766 = vmul.f32 %v752, 1.442695
    %v767 = vpow.pop %v766
    %v768 = vmul.f32 %v753, 1.442695
    %v769 = vpow.pop %v768
    %v770 = vsel %vm721, %v755, 0.0
    %771 = vadd.xlane.f32.xlu0 %v770
    %v772 = vpop.xlane.xlu0 %771
    %v773 = vsel %vm721, %v757, 0.0
    %774 = vadd.xlane.f32.xlu0 %v773
    %v775 = vpop.xlane.xlu0 %774
    %v776 = vsel %vm721, %v759, 0.0
    %777 = vadd.xlane.f32.xlu0 %v776
    %v778 = vpop.xlane.xlu0 %777
    %v779 = vsel %vm721, %v761, 0.0
    %780 = vadd.xlane.f32.xlu0 %v779
    %v781 = vpop.xlane.xlu0 %780
    %v782 = vsel %vm721, %v763, 0.0
    %783 = vadd.xlane.f32.xlu0 %v782
    %v784 = vpop.xlane.xlu0 %783
    %v785 = vsel %vm721, %v765, 0.0
    %786 = vadd.xlane.f32.xlu0 %v785
    %v787 = vpop.xlane.xlu0 %786
    %v788 = vsel %vm721, %v767, 0.0
    %789 = vadd.xlane.f32.xlu0 %v788
    %v790 = vpop.xlane.xlu0 %789
    %v791 = vsel %vm721, %v769, 0.0
    %792 = vadd.xlane.f32.xlu0 %v791
    %v793 = vpop.xlane.xlu0 %792
    %v794 = vrcp.pop %v772
    %v795 = vmul.f32 %v755, %v794
    %v796 = vrcp.pop %v775
    %v797 = vmul.f32 %v757, %v796
    %v798 = vrcp.pop %v778
    %v799 = vmul.f32 %v759, %v798
    %v800 = vrcp.pop %v781
    %v801 = vmul.f32 %v761, %v800
    %v802 = vrcp.pop %v784
    %v803 = vmul.f32 %v763, %v802
    %v804 = vrcp.pop %v787
    %v805 = vmul.f32 %v765, %v804
    %v806 = vrcp.pop %v790
    %v807 = vmul.f32 %v767, %v806
    %v808 = vrcp.pop %v793
    %v809 = vmul.f32 %v769, %v808
    %812 = vrot.lane.b32.xlu0 %v158, 64
    %v813 = vpop.permute.xlu0 %812
    %814 = vrot.lane.b32.xlu0 %v163, 64
    %v815 = vpop.permute.xlu0 %814
    %v819 = vsel %vm721, %v795, 0
    %v822 = vsel %vm721, %v797, 0
    %v825 = vsel %vm721, %v799, 0
    %v828 = vsel %vm721, %v801, 0
    %v831 = vsel %vm721, %v803, 0
    %v834 = vsel %vm721, %v805, 0
    %v837 = vsel %vm721, %v807, 0
    %v840 = vsel %vm721, %v809, 0
    %842 = vmatprep.subr.mxu0 0.0
    %843 = vmatpush1.msra.mxu0 0.0
    %844 = vmatprep.subr.mxu0 0.0
    %845 = vmatpush1.msra.mxu0 0.0
    %846 = vmatprep.subr.mxu0 0.0
    %847 = vmatpush1.msra.mxu0 0.0
    %848 = vmatprep.subr.mxu0 0.0
    %849 = vmatpush1.msra.mxu0 0.0
    %850 = vmatprep.subr.mxu0 0.0
    %851 = vmatpush1.msra.mxu0 0.0
    %852 = vmatprep.subr.mxu0 0.0
    %853 = vmatpush1.msra.mxu0 0.0
    %854 = vmatprep.subr.mxu0 0.0
    %855 = vmatpush1.msra.mxu0 0.0
    %856 = vmatprep.subr.mxu0 0.0
    %857 = vmatpush1.msra.mxu0 0.0
    %858 = vmatprep.subr.mxu0 0.0
    %859 = vmatpush1.msra.mxu0 0.0
    %860 = vmatprep.subr.mxu0 0.0
    %861 = vmatpush1.msra.mxu0 0.0
    %862 = vmatprep.subr.mxu0 0.0
    %863 = vmatpush1.msra.mxu0 0.0
    %864 = vmatprep.subr.mxu0 0.0
    %865 = vmatpush1.msra.mxu0 0.0
    %866 = vmatprep.subr.mxu0 0.0
    %867 = vmatpush1.msra.mxu0 0.0
    %868 = vmatprep.subr.mxu0 0.0
    %869 = vmatpush1.msra.mxu0 0.0
    %870 = vmatprep.subr.mxu0 0.0
    %871 = vmatpush1.msra.mxu0 %v815
    %872 = vmatprep.subr.mxu0 0.0
    %873 = vmatpush1.msra.mxu0 %v813
    %874 = vmatprep.subr.mxu0 0.0
    %875 = vmatpush2.msra.mxu0 0.0
    %876 = vmatprep.subr.mxu0 0.0
    %877 = vmatpush2.msra.mxu0 0.0
    %878 = vmatprep.subr.mxu0 0.0
    %879 = vmatpush2.msra.mxu0 0.0
    %880 = vmatprep.subr.mxu0 0.0
    %881 = vmatpush2.msra.mxu0 0.0
    %882 = vmatprep.subr.mxu0 0.0
    %883 = vmatpush2.msra.mxu0 0.0
    %884 = vmatprep.subr.mxu0 0.0
    %885 = vmatpush2.msra.mxu0 0.0
    %886 = vmatprep.subr.mxu0 0.0
    %887 = vmatpush2.msra.mxu0 0.0
    %888 = vmatprep.subr.mxu0 0.0
    %889 = vmatpush2.msra.mxu0 0.0
    %890 = vmatprep.subr.mxu0 0.0
    %891 = vmatpush2.msra.mxu0 0.0
    %892 = vmatprep.subr.mxu0 0.0
    %893 = vmatpush2.msra.mxu0 0.0
    %894 = vmatprep.subr.mxu0 0.0
    %895 = vmatpush2.msra.mxu0 0.0
    %896 = vmatprep.subr.mxu0 0.0
    %897 = vmatpush2.msra.mxu0 0.0
    %898 = vmatprep.subr.mxu0 0.0
    %899 = vmatpush2.msra.mxu0 0.0
    %900 = vmatprep.subr.mxu0 0.0
    %901 = vmatpush2.msra.mxu0 0.0
    %902 = vmatprep.subr.mxu0 0.0
    %903 = vmatpush2.msra.mxu0 0.0
    %904 = vmatprep.subr.mxu0 0.0
    %905 = vmatpush2.msra.mxu0 0.0
    %906 = vmatprep.mubr.f32.mxu0 0.0
    %907 = vmatmul.mubr.f32.gmra.mxu0 %v819
    %v908 = vpop.f32.mrf.mxu0
    %v909 = vadd.f32 0.0, %v908
    %v910 = vpop.f32.mrf.mxu0
    %911 = vmatprep.mubr.f32.mxu0 0.0
    %912 = vmatmul.mubr.f32.gmra.mxu0 %v822
    %v913 = vpop.f32.mrf.mxu0
    %v914 = vadd.f32 0.0, %v913
    %v915 = vpop.f32.mrf.mxu0
    %916 = vmatprep.mubr.f32.mxu0 0.0
    %917 = vmatmul.mubr.f32.gmra.mxu0 %v825
    %v918 = vpop.f32.mrf.mxu0
    %v919 = vadd.f32 0.0, %v918
    %v920 = vpop.f32.mrf.mxu0
    %921 = vmatprep.mubr.f32.mxu0 0.0
    %922 = vmatmul.mubr.f32.gmra.mxu0 %v828
    %v923 = vpop.f32.mrf.mxu0
    %v924 = vadd.f32 0.0, %v923
    %v925 = vpop.f32.mrf.mxu0
    %926 = vmatprep.mubr.f32.mxu0 0.0
    %927 = vmatmul.mubr.f32.gmra.mxu0 %v831
    %v928 = vpop.f32.mrf.mxu0
    %v929 = vadd.f32 0.0, %v928
    %v930 = vpop.f32.mrf.mxu0
    %931 = vmatprep.mubr.f32.mxu0 0.0
    %932 = vmatmul.mubr.f32.gmra.mxu0 %v834
    %v933 = vpop.f32.mrf.mxu0
    %v934 = vadd.f32 0.0, %v933
    %v935 = vpop.f32.mrf.mxu0
    %936 = vmatprep.mubr.f32.mxu0 0.0
    %937 = vmatmul.mubr.f32.gmra.mxu0 %v837
    %v938 = vpop.f32.mrf.mxu0
    %v939 = vadd.f32 0.0, %v938
    %v940 = vpop.f32.mrf.mxu0
    %941 = vmatprep.mubr.f32.mxu0 0.0
    %942 = vmatmul.mubr.f32.gmra.mxu0 %v840
    %v943 = vpop.f32.mrf.mxu0
    %v944 = vadd.f32 0.0, %v943
    %v945 = vpop.f32.mrf.mxu0
    %946 = vdwg.mxu0
    %v947 = vmul.f32 %v909, %v265
    %v948 = vmul.f32 %v914, %v266
    %v949 = vmul.f32 %v919, %v267
    %v950 = vmul.f32 %v924, %v268
    %v951 = vmul.f32 %v929, %v269
    %v952 = vmul.f32 %v934, %v270
    %v953 = vmul.f32 %v939, %v271
    %v954 = vmul.f32 %v944, %v272
    %v955 = vadd.f32 %v947, %v949
    %v956 = vadd.f32 %v948, %v950
    %v957 = vadd.f32 %v955, %v951
    %v958 = vadd.f32 %v956, %v952
    %v959 = vadd.f32 %v957, %v953
    %v960 = vadd.f32 %v958, %v954
    %v961 = vlaneseq
    %v962 = vshrl.u32 %v961, 7
    %v963 = vsub.s32 0, %v962
    %v964 = vrot.slane %v64, %v963
    %v966 = vsel %vm68, %v959, 0
    %v969 = vsel %vm68, %v960, 0
    %971 = vmatprep.subr.mxu0 0.0
    %972 = vmatpush1.msra.mxu0 0.0
    %973 = vmatprep.subr.mxu0 0.0
    %974 = vmatpush1.msra.mxu0 0.0
    %975 = vmatprep.subr.mxu0 0.0
    %976 = vmatpush1.msra.mxu0 0.0
    %977 = vmatprep.subr.mxu0 0.0
    %978 = vmatpush1.msra.mxu0 0.0
    %979 = vmatprep.subr.mxu0 0.0
    %980 = vmatpush1.msra.mxu0 0.0
    %981 = vmatprep.subr.mxu0 0.0
    %982 = vmatpush1.msra.mxu0 0.0
    %983 = vmatprep.subr.mxu0 0.0
    %984 = vmatpush1.msra.mxu0 0.0
    %985 = vmatprep.subr.mxu0 0.0
    %986 = vmatpush1.msra.mxu0 0.0
    %987 = vmatprep.subr.mxu0 0.0
    %988 = vmatpush1.msra.mxu0 0.0
    %989 = vmatprep.subr.mxu0 0.0
    %990 = vmatpush1.msra.mxu0 0.0
    %991 = vmatprep.subr.mxu0 0.0
    %992 = vmatpush1.msra.mxu0 0.0
    %993 = vmatprep.subr.mxu0 0.0
    %994 = vmatpush1.msra.mxu0 0.0
    %995 = vmatprep.subr.mxu0 0.0
    %996 = vmatpush1.msra.mxu0 %v47
    %997 = vmatprep.subr.mxu0 0.0
    %998 = vmatpush1.msra.mxu0 %v46
    %999 = vmatprep.subr.mxu0 0.0
    %1000 = vmatpush1.msra.mxu0 %v45
    %1001 = vmatprep.subr.mxu0 0.0
    %1002 = vmatpush1.msra.mxu0 %v44
    %1003 = vmatprep.subr.mxu0 0.0
    %1004 = vmatpush2.msra.mxu0 0.0
    %1005 = vmatprep.subr.mxu0 0.0
    %1006 = vmatpush2.msra.mxu0 0.0
    %1007 = vmatprep.subr.mxu0 0.0
    %1008 = vmatpush2.msra.mxu0 0.0
    %1009 = vmatprep.subr.mxu0 0.0
    %1010 = vmatpush2.msra.mxu0 0.0
    %1011 = vmatprep.subr.mxu0 0.0
    %1012 = vmatpush2.msra.mxu0 0.0
    %1013 = vmatprep.subr.mxu0 0.0
    %1014 = vmatpush2.msra.mxu0 0.0
    %1015 = vmatprep.subr.mxu0 0.0
    %1016 = vmatpush2.msra.mxu0 0.0
    %1017 = vmatprep.subr.mxu0 0.0
    %1018 = vmatpush2.msra.mxu0 0.0
    %1019 = vmatprep.subr.mxu0 0.0
    %1020 = vmatpush2.msra.mxu0 0.0
    %1021 = vmatprep.subr.mxu0 0.0
    %1022 = vmatpush2.msra.mxu0 0.0
    %1023 = vmatprep.subr.mxu0 0.0
    %1024 = vmatpush2.msra.mxu0 0.0
    %1025 = vmatprep.subr.mxu0 0.0
    %1026 = vmatpush2.msra.mxu0 0.0
    %1027 = vmatprep.subr.mxu0 0.0
    %1028 = vmatpush2.msra.mxu0 0.0
    %1029 = vmatprep.subr.mxu0 0.0
    %1030 = vmatpush2.msra.mxu0 0.0
    %1031 = vmatprep.subr.mxu0 0.0
    %1032 = vmatpush2.msra.mxu0 0.0
    %1033 = vmatprep.subr.mxu0 0.0
    %1034 = vmatpush2.msra.mxu0 0.0
    %1035 = vmatprep.mubr.f32.mxu0 0.0
    %1036 = vmatmul.mubr.f32.gmra.mxu0 %v966
    %v1037 = vpop.f32.mrf.mxu0
    %v1038 = vadd.f32 %v964, %v1037
    %v1039 = vpop.f32.mrf.mxu0
    %1040 = vmatprep.mubr.f32.mxu0 0.0
    %1041 = vmatmul.mubr.f32.gmra.mxu0 %v969
    %v1042 = vpop.f32.mrf.mxu0
    %v1043 = vadd.f32 %v964, %v1042
    %v1044 = vpop.f32.mrf.mxu0
    %1045 = vdwg.mxu0
    %v1046 = vadd.f32 %v24, %v1038
    %v1047 = vadd.f32 %v25, %v1043
    %v1048 = vsel %vm68, %v1046, 0.0
    %1049 = vadd.xlane.f32.xlu0 %v1048
    %v1050 = vpop.xlane.xlu0 %1049
    %v1051 = vsel %vm68, %v1047, 0.0
    %1052 = vadd.xlane.f32.xlu0 %v1051
    %v1053 = vpop.xlane.xlu0 %1052
    %v1054 = vrcp.pop 32.0
    %v1055 = vmul.f32 %v1050, %v1054
    %v1056 = vmul.f32 %v1053, %v1054
    %v1057 = vsub.f32 %v1046, %v1055
    %v1058 = vsub.f32 %v1047, %v1056
    %v1059 = vmul.f32 %v1057, %v1057
    %v1060 = vmul.f32 %v1058, %v1058
    %v1061 = vsel %vm68, %v1059, 0.0
    %1062 = vadd.xlane.f32.xlu0 %v1061
    %v1063 = vpop.xlane.xlu0 %1062
    %v1064 = vsel %vm68, %v1060, 0.0
    %1065 = vadd.xlane.f32.xlu0 %v1064
    %v1066 = vpop.xlane.xlu0 %1065
    %v1067 = vmul.f32 %v1063, %v1054
    %v1068 = vmul.f32 %v1066, %v1054
    %v1069 = vadd.f32 %v1067, 1e-05
    %v1070 = vadd.f32 %v1068, 1e-05
    %v1071 = vrsqrt.pop %v1069
    %v1072 = vrsqrt.pop %v1070
    %v1073 = vmul.f32 %v1057, %v1071
    %v1074 = vmul.f32 %v1058, %v1072
    %v1075 = vlaneseq
    %v1076 = vshrl.u32 %v1075, 7
    %v1077 = vsub.s32 4, %v1076
    %v1078 = vrot.slane %v64, %v1077
    %v1079 = vmul.f32 %v1073, %v1078
    %v1080 = vmul.f32 %v1074, %v1078
    %v1081 = vlaneseq
    %v1082 = vshrl.u32 %v1081, 7
    %v1083 = vsub.s32 5, %v1082
    %v1084 = vrot.slane %v64, %v1083
    %v1085 = vadd.f32 %v1079, %v1084
    %v1086 = vadd.f32 %v1080, %v1084
    %v1087 = vadd.f32 %v1085, %v30
    %v1088 = vadd.f32 %v1086, %v31
    %v1089 = vadd.f32 %v26, %v32
    %v1090 = vadd.f32 %v27, %v33
    %v1091 = vadd.f32 %v28, %v34
    %v1092 = vadd.f32 %v29, %v35
    %v1094 = vsel %vm68, %v1087, 0
    %v1097 = vsel %vm68, %v1088, 0
    %v1100 = vsel %vm68, %v1089, 0
    %v1103 = vsel %vm68, %v1090, 0
    %v1106 = vsel %vm68, %v1091, 0
    %v1109 = vsel %vm68, %v1092, 0
    %v1112 = vsel %vm68, %v26, 0
    %v1115 = vsel %vm68, %v27, 0
    %v1118 = vsel %vm68, %v28, 0
    %v1121 = vsel %vm68, %v29, 0
    %1123 = vmatprep.subr.mxu0 0.0
    %1124 = vmatpush1.msra.mxu0 0.0
    %1125 = vmatprep.subr.mxu0 0.0
    %1126 = vmatpush1.msra.mxu0 0.0
    %1127 = vmatprep.subr.mxu0 0.0
    %1128 = vmatpush1.msra.mxu0 0.0
    %1129 = vmatprep.subr.mxu0 0.0
    %1130 = vmatpush1.msra.mxu0 0.0
    %1131 = vmatprep.subr.mxu0 0.0
    %1132 = vmatpush1.msra.mxu0 0.0
    %1133 = vmatprep.subr.mxu0 0.0
    %1134 = vmatpush1.msra.mxu0 0.0
    %1135 = vmatprep.subr.mxu0 0.0
    %1136 = vmatpush1.msra.mxu0 0.0
    %1137 = vmatprep.subr.mxu0 0.0
    %1138 = vmatpush1.msra.mxu0 0.0
    %1139 = vmatprep.subr.mxu0 0.0
    %1140 = vmatpush1.msra.mxu0 0.0
    %1141 = vmatprep.subr.mxu0 0.0
    %1142 = vmatpush1.msra.mxu0 0.0
    %1143 = vmatprep.subr.mxu0 0.0
    %1144 = vmatpush1.msra.mxu0 0.0
    %1145 = vmatprep.subr.mxu0 0.0
    %1146 = vmatpush1.msra.mxu0 0.0
    %1147 = vmatprep.subr.mxu0 0.0
    %1148 = vmatpush1.msra.mxu0 %v43
    %1149 = vmatprep.subr.mxu0 0.0
    %1150 = vmatpush1.msra.mxu0 %v42
    %1151 = vmatprep.subr.mxu0 0.0
    %1152 = vmatpush1.msra.mxu0 %v41
    %1153 = vmatprep.subr.mxu0 0.0
    %1154 = vmatpush1.msra.mxu0 %v40
    %1155 = vmatprep.subr.mxu0 0.0
    %1156 = vmatpush2.msra.mxu0 0.0
    %1157 = vmatprep.subr.mxu0 0.0
    %1158 = vmatpush2.msra.mxu0 0.0
    %1159 = vmatprep.subr.mxu0 0.0
    %1160 = vmatpush2.msra.mxu0 0.0
    %1161 = vmatprep.subr.mxu0 0.0
    %1162 = vmatpush2.msra.mxu0 0.0
    %1163 = vmatprep.subr.mxu0 0.0
    %1164 = vmatpush2.msra.mxu0 0.0
    %1165 = vmatprep.subr.mxu0 0.0
    %1166 = vmatpush2.msra.mxu0 0.0
    %1167 = vmatprep.subr.mxu0 0.0
    %1168 = vmatpush2.msra.mxu0 0.0
    %1169 = vmatprep.subr.mxu0 0.0
    %1170 = vmatpush2.msra.mxu0 0.0
    %1171 = vmatprep.subr.mxu0 0.0
    %1172 = vmatpush2.msra.mxu0 0.0
    %1173 = vmatprep.subr.mxu0 0.0
    %1174 = vmatpush2.msra.mxu0 0.0
    %1175 = vmatprep.subr.mxu0 0.0
    %1176 = vmatpush2.msra.mxu0 0.0
    %1177 = vmatprep.subr.mxu0 0.0
    %1178 = vmatpush2.msra.mxu0 0.0
    %1179 = vmatprep.subr.mxu0 0.0
    %1180 = vmatpush2.msra.mxu0 0.0
    %1181 = vmatprep.subr.mxu0 0.0
    %1182 = vmatpush2.msra.mxu0 0.0
    %1183 = vmatprep.subr.mxu0 0.0
    %1184 = vmatpush2.msra.mxu0 0.0
    %1185 = vmatprep.subr.mxu0 0.0
    %1186 = vmatpush2.msra.mxu0 0.0
    %1187 = vmatprep.mubr.f32.mxu0 0.0
    %1188 = vmatmul.mubr.f32.gmra.mxu0 %v1094
    %v1189 = vpop.f32.mrf.mxu0
    %v1190 = vadd.f32 0.0, %v1189
    %v1191 = vpop.f32.mrf.mxu0
    %1192 = vmatprep.mubr.f32.mxu0 0.0
    %1193 = vmatmul.mubr.f32.gmra.mxu0 %v1097
    %v1194 = vpop.f32.mrf.mxu0
    %v1195 = vadd.f32 0.0, %v1194
    %v1196 = vpop.f32.mrf.mxu0
    %1197 = vmatprep.mubr.f32.mxu0 0.0
    %1198 = vmatmul.mubr.f32.gmra.mxu0 %v1100
    %v1199 = vpop.f32.mrf.mxu0
    %v1200 = vadd.f32 0.0, %v1199
    %v1201 = vpop.f32.mrf.mxu0
    %1202 = vmatprep.mubr.f32.mxu0 0.0
    %1203 = vmatmul.mubr.f32.gmra.mxu0 %v1103
    %v1204 = vpop.f32.mrf.mxu0
    %v1205 = vadd.f32 0.0, %v1204
    %v1206 = vpop.f32.mrf.mxu0
    %1207 = vmatprep.mubr.f32.mxu0 0.0
    %1208 = vmatmul.mubr.f32.gmra.mxu0 %v1106
    %v1209 = vpop.f32.mrf.mxu0
    %v1210 = vadd.f32 0.0, %v1209
    %v1211 = vpop.f32.mrf.mxu0
    %1212 = vmatprep.mubr.f32.mxu0 0.0
    %1213 = vmatmul.mubr.f32.gmra.mxu0 %v1109
    %v1214 = vpop.f32.mrf.mxu0
    %v1215 = vadd.f32 0.0, %v1214
    %v1216 = vpop.f32.mrf.mxu0
    %1217 = vmatprep.mubr.f32.mxu0 0.0
    %1218 = vmatmul.mubr.f32.gmra.mxu0 %v1112
    %v1219 = vpop.f32.mrf.mxu0
    %v1220 = vadd.f32 0.0, %v1219
    %v1221 = vpop.f32.mrf.mxu0
    %1222 = vmatprep.mubr.f32.mxu0 0.0
    %1223 = vmatmul.mubr.f32.gmra.mxu0 %v1115
    %v1224 = vpop.f32.mrf.mxu0
    %v1225 = vadd.f32 0.0, %v1224
    %v1226 = vpop.f32.mrf.mxu0
    %1227 = vmatprep.mubr.f32.mxu0 0.0
    %1228 = vmatmul.mubr.f32.gmra.mxu0 %v1118
    %v1229 = vpop.f32.mrf.mxu0
    %v1230 = vadd.f32 0.0, %v1229
    %v1231 = vpop.f32.mrf.mxu0
    %1232 = vmatprep.mubr.f32.mxu0 0.0
    %1233 = vmatmul.mubr.f32.gmra.mxu0 %v1121
    %v1234 = vpop.f32.mrf.mxu0
    %v1235 = vadd.f32 0.0, %v1234
    %v1236 = vpop.f32.mrf.mxu0
    %1237 = vdwg.mxu0
    %vm1238 = vmand %vm297, %vm332
    %vm1239 = vmand %vm289, %vm1238
    %vm1240 = vmand %vm290, %vm1238
    %vm1241 = vmand %vm291, %vm1238
    %vm1242 = vmand %vm292, %vm1238
    %vm1243 = vmand %vm293, %vm1238
    %vm1244 = vmand %vm294, %vm1238
    %vm1245 = vmand %vm295, %vm1238
    %vm1246 = vmand %vm296, %vm1238
    %vm1247 = vcmp.lt.s32.totalorder %v176, 32
    %vm1248 = vmand %vm219, %vm1247
    %vm1249 = vmand %vm324, %vm1248
    %vm1250 = vmand %vm325, %vm1248
    %vm1251 = vmand %vm326, %vm1248
    %vm1252 = vmand %vm327, %vm1248
    %vm1253 = vmand %vm328, %vm1248
    %vm1254 = vmand %vm329, %vm1248
    %vm1255 = vmand %vm330, %vm1248
    %vm1256 = vmand %vm331, %vm1248
    %vm1257 = vmor %vm1239, %vm1249
    %vm1258 = vmor %vm1240, %vm1250
    %vm1259 = vmor %vm1241, %vm1251
    %vm1260 = vmor %vm1242, %vm1252
    %vm1261 = vmor %vm1243, %vm1253
    %vm1262 = vmor %vm1244, %vm1254
    %vm1263 = vmor %vm1245, %vm1255
    %vm1264 = vmor %vm1246, %vm1256
    %vm1265 = vmand %vm358, %vm1238
    %vm1266 = vmand %vm359, %vm1238
    %vm1267 = vmand %vm360, %vm1238
    %vm1268 = vmand %vm361, %vm1238
    %vm1269 = vmand %vm362, %vm1238
    %vm1270 = vmand %vm363, %vm1238
    %vm1271 = vmand %vm364, %vm1238
    %vm1272 = vmand %vm365, %vm1238
    %vm1273 = vmor %vm1257, %vm1265
    %vm1274 = vmor %vm1258, %vm1266
    %vm1275 = vmor %vm1259, %vm1267
    %vm1276 = vmor %vm1260, %vm1268
    %vm1277 = vmor %vm1261, %vm1269
    %vm1278 = vmor %vm1262, %vm1270
    %vm1279 = vmor %vm1263, %vm1271
    %vm1280 = vmor %vm1264, %vm1272
    %vm1281 = vmand %vm398, %vm1248
    %vm1282 = vmand %vm399, %vm1248
    %vm1283 = vmand %vm400, %vm1248
    %vm1284 = vmand %vm401, %vm1248
    %vm1285 = vmand %vm402, %vm1248
    %vm1286 = vmand %vm403, %vm1248
    %vm1287 = vmand %vm404, %vm1248
    %vm1288 = vmand %vm405, %vm1248
    %vm1289 = vmor %vm1273, %vm1281
    %vm1290 = vmor %vm1274, %vm1282
    %vm1291 = vmor %vm1275, %vm1283
    %vm1292 = vmor %vm1276, %vm1284
    %vm1293 = vmor %vm1277, %vm1285
    %vm1294 = vmor %vm1278, %vm1286
    %vm1295 = vmor %vm1279, %vm1287
    %vm1296 = vmor %vm1280, %vm1288
    %vm1297 = vmand %vm430, %vm1238
    %vm1298 = vmand %vm431, %vm1238
    %vm1299 = vmand %vm432, %vm1238
    %vm1300 = vmand %vm433, %vm1238
    %vm1301 = vmand %vm434, %vm1238
    %vm1302 = vmand %vm435, %vm1238
    %vm1303 = vmand %vm436, %vm1238
    %vm1304 = vmand %vm437, %vm1238
    %vm1305 = vmor %vm1289, %vm1297
    %vm1306 = vmor %vm1290, %vm1298
    %vm1307 = vmor %vm1291, %vm1299
    %vm1308 = vmor %vm1292, %vm1300
    %vm1309 = vmor %vm1293, %vm1301
    %vm1310 = vmor %vm1294, %vm1302
    %vm1311 = vmor %vm1295, %vm1303
    %vm1312 = vmor %vm1296, %vm1304
    %vm1313 = vmand %vm470, %vm1248
    %vm1314 = vmand %vm471, %vm1248
    %vm1315 = vmand %vm472, %vm1248
    %vm1316 = vmand %vm473, %vm1248
    %vm1317 = vmand %vm474, %vm1248
    %vm1318 = vmand %vm475, %vm1248
    %vm1319 = vmand %vm476, %vm1248
    %vm1320 = vmand %vm477, %vm1248
    %vm1321 = vmor %vm1305, %vm1313
    %vm1322 = vmor %vm1306, %vm1314
    %vm1323 = vmor %vm1307, %vm1315
    %vm1324 = vmor %vm1308, %vm1316
    %vm1325 = vmor %vm1309, %vm1317
    %vm1326 = vmor %vm1310, %vm1318
    %vm1327 = vmor %vm1311, %vm1319
    %vm1328 = vmor %vm1312, %vm1320
    %vm1329 = vmand %vm502, %vm1238
    %vm1330 = vmand %vm503, %vm1238
    %vm1331 = vmand %vm504, %vm1238
    %vm1332 = vmand %vm505, %vm1238
    %vm1333 = vmand %vm506, %vm1238
    %vm1334 = vmand %vm507, %vm1238
    %vm1335 = vmand %vm508, %vm1238
    %vm1336 = vmand %vm509, %vm1238
    %vm1337 = vmor %vm1321, %vm1329
    %vm1338 = vmor %vm1322, %vm1330
    %vm1339 = vmor %vm1323, %vm1331
    %vm1340 = vmor %vm1324, %vm1332
    %vm1341 = vmor %vm1325, %vm1333
    %vm1342 = vmor %vm1326, %vm1334
    %vm1343 = vmor %vm1327, %vm1335
    %vm1344 = vmor %vm1328, %vm1336
    %vm1345 = vmand %vm542, %vm1248
    %vm1346 = vmand %vm543, %vm1248
    %vm1347 = vmand %vm544, %vm1248
    %vm1348 = vmand %vm545, %vm1248
    %vm1349 = vmand %vm546, %vm1248
    %vm1350 = vmand %vm547, %vm1248
    %vm1351 = vmand %vm548, %vm1248
    %vm1352 = vmand %vm549, %vm1248
    %vm1353 = vmor %vm1337, %vm1345
    %vm1354 = vmor %vm1338, %vm1346
    %vm1355 = vmor %vm1339, %vm1347
    %vm1356 = vmor %vm1340, %vm1348
    %vm1357 = vmor %vm1341, %vm1349
    %vm1358 = vmor %vm1342, %vm1350
    %vm1359 = vmor %vm1343, %vm1351
    %vm1360 = vmor %vm1344, %vm1352
    %v1361 = vsel %vm1353, 0.0, -1e+30
    %v1362 = vsel %vm1354, 0.0, -1e+30
    %v1363 = vsel %vm1355, 0.0, -1e+30
    %v1364 = vsel %vm1356, 0.0, -1e+30
    %v1365 = vsel %vm1357, 0.0, -1e+30
    %v1366 = vsel %vm1358, 0.0, -1e+30
    %v1367 = vsel %vm1359, 0.0, -1e+30
    %v1368 = vsel %vm1360, 0.0, -1e+30
    %v1369 = vmul.f32 %v1190, %v265
    %v1370 = vmul.f32 %v1195, %v266
    %v1371 = vmul.f32 %v1190, %v267
    %v1372 = vmul.f32 %v1195, %v268
    %v1373 = vmul.f32 %v1190, %v269
    %v1374 = vmul.f32 %v1195, %v270
    %v1375 = vmul.f32 %v1190, %v271
    %v1376 = vmul.f32 %v1195, %v272
    %1381 = vrot.lane.b32.xlu0 %v1200, 96
    %v1382 = vpop.permute.xlu0 %1381
    %1383 = vrot.lane.b32.xlu0 %v1205, 96
    %v1384 = vpop.permute.xlu0 %1383
    %1385 = vrot.lane.b32.xlu0 %v1210, 96
    %v1386 = vpop.permute.xlu0 %1385
    %1387 = vrot.lane.b32.xlu0 %v1215, 96
    %v1388 = vpop.permute.xlu0 %1387
    %v1390 = vsel %vm68, %v1369, 0
    %v1393 = vsel %vm68, %v1370, 0
    %v1396 = vsel %vm68, %v1371, 0
    %v1399 = vsel %vm68, %v1372, 0
    %v1402 = vsel %vm68, %v1373, 0
    %v1405 = vsel %vm68, %v1374, 0
    %v1408 = vsel %vm68, %v1375, 0
    %v1411 = vsel %vm68, %v1376, 0
    %v1413 = vsel %vm68, %v1382, 0
    %v1415 = vsel %vm68, %v1384, 0
    %v1417 = vsel %vm68, %v1386, 0
    %v1419 = vsel %vm68, %v1388, 0
    %1421 = vmatprep.subr.mxu0 0.0
    %1422 = vmatpush1.xpose.msra.mxu0 0.0
    %1423 = vmatprep.subr.mxu0 0.0
    %1424 = vmatpush1.xpose.msra.mxu0 0.0
    %1425 = vmatprep.subr.mxu0 0.0
    %1426 = vmatpush1.xpose.msra.mxu0 0.0
    %1427 = vmatprep.subr.mxu0 0.0
    %1428 = vmatpush1.xpose.msra.mxu0 0.0
    %1429 = vmatprep.subr.mxu0 0.0
    %1430 = vmatpush1.xpose.msra.mxu0 0.0
    %1431 = vmatprep.subr.mxu0 0.0
    %1432 = vmatpush1.xpose.msra.mxu0 0.0
    %1433 = vmatprep.subr.mxu0 0.0
    %1434 = vmatpush1.xpose.msra.mxu0 0.0
    %1435 = vmatprep.subr.mxu0 0.0
    %1436 = vmatpush1.xpose.msra.mxu0 0.0
    %1437 = vmatprep.subr.mxu0 0.0
    %1438 = vmatpush1.xpose.msra.mxu0 0.0
    %1439 = vmatprep.subr.mxu0 0.0
    %1440 = vmatpush1.xpose.msra.mxu0 0.0
    %1441 = vmatprep.subr.mxu0 0.0
    %1442 = vmatpush1.xpose.msra.mxu0 0.0
    %1443 = vmatprep.subr.mxu0 0.0
    %1444 = vmatpush1.xpose.msra.mxu0 0.0
    %1445 = vmatprep.subr.mxu0 0.0
    %1446 = vmatpush1.xpose.msra.mxu0 %v1419
    %1447 = vmatprep.subr.mxu0 0.0
    %1448 = vmatpush1.xpose.msra.mxu0 %v1417
    %1449 = vmatprep.subr.mxu0 0.0
    %1450 = vmatpush1.xpose.msra.mxu0 %v1415
    %1451 = vmatprep.subr.mxu0 0.0
    %1452 = vmatpush1.xpose.msra.mxu0 %v1413
    %1453 = vmatprep.subr.mxu0 0.0
    %1454 = vmatpush2.xpose.msra.mxu0 0.0
    %1455 = vmatprep.subr.mxu0 0.0
    %1456 = vmatpush2.xpose.msra.mxu0 0.0
    %1457 = vmatprep.subr.mxu0 0.0
    %1458 = vmatpush2.xpose.msra.mxu0 0.0
    %1459 = vmatprep.subr.mxu0 0.0
    %1460 = vmatpush2.xpose.msra.mxu0 0.0
    %1461 = vmatprep.subr.mxu0 0.0
    %1462 = vmatpush2.xpose.msra.mxu0 0.0
    %1463 = vmatprep.subr.mxu0 0.0
    %1464 = vmatpush2.xpose.msra.mxu0 0.0
    %1465 = vmatprep.subr.mxu0 0.0
    %1466 = vmatpush2.xpose.msra.mxu0 0.0
    %1467 = vmatprep.subr.mxu0 0.0
    %1468 = vmatpush2.xpose.msra.mxu0 0.0
    %1469 = vmatprep.subr.mxu0 0.0
    %1470 = vmatpush2.xpose.msra.mxu0 0.0
    %1471 = vmatprep.subr.mxu0 0.0
    %1472 = vmatpush2.xpose.msra.mxu0 0.0
    %1473 = vmatprep.subr.mxu0 0.0
    %1474 = vmatpush2.xpose.msra.mxu0 0.0
    %1475 = vmatprep.subr.mxu0 0.0
    %1476 = vmatpush2.xpose.msra.mxu0 0.0
    %1477 = vmatprep.subr.mxu0 0.0
    %1478 = vmatpush2.xpose.msra.mxu0 0.0
    %1479 = vmatprep.subr.mxu0 0.0
    %1480 = vmatpush2.xpose.msra.mxu0 0.0
    %1481 = vmatprep.subr.mxu0 0.0
    %1482 = vmatpush2.xpose.msra.mxu0 0.0
    %1483 = vmatprep.subr.mxu0 0.0
    %1484 = vmatpush2.xpose.msra.mxu0 0.0
    %1485 = vmatprep.mubr.f32.mxu0 0.0
    %1486 = vmatmul.mubr.f32.gmra.mxu0 %v1390
    %v1487 = vpop.f32.mrf.mxu0
    %v1488 = vadd.f32 %v1361, %v1487
    %v1489 = vpop.f32.mrf.mxu0
    %1490 = vmatprep.mubr.f32.mxu0 0.0
    %1491 = vmatmul.mubr.f32.gmra.mxu0 %v1393
    %v1492 = vpop.f32.mrf.mxu0
    %v1493 = vadd.f32 %v1362, %v1492
    %v1494 = vpop.f32.mrf.mxu0
    %1495 = vmatprep.mubr.f32.mxu0 0.0
    %1496 = vmatmul.mubr.f32.gmra.mxu0 %v1396
    %v1497 = vpop.f32.mrf.mxu0
    %v1498 = vadd.f32 %v1363, %v1497
    %v1499 = vpop.f32.mrf.mxu0
    %1500 = vmatprep.mubr.f32.mxu0 0.0
    %1501 = vmatmul.mubr.f32.gmra.mxu0 %v1399
    %v1502 = vpop.f32.mrf.mxu0
    %v1503 = vadd.f32 %v1364, %v1502
    %v1504 = vpop.f32.mrf.mxu0
    %1505 = vmatprep.mubr.f32.mxu0 0.0
    %1506 = vmatmul.mubr.f32.gmra.mxu0 %v1402
    %v1507 = vpop.f32.mrf.mxu0
    %v1508 = vadd.f32 %v1365, %v1507
    %v1509 = vpop.f32.mrf.mxu0
    %1510 = vmatprep.mubr.f32.mxu0 0.0
    %1511 = vmatmul.mubr.f32.gmra.mxu0 %v1405
    %v1512 = vpop.f32.mrf.mxu0
    %v1513 = vadd.f32 %v1366, %v1512
    %v1514 = vpop.f32.mrf.mxu0
    %1515 = vmatprep.mubr.f32.mxu0 0.0
    %1516 = vmatmul.mubr.f32.gmra.mxu0 %v1408
    %v1517 = vpop.f32.mrf.mxu0
    %v1518 = vadd.f32 %v1367, %v1517
    %v1519 = vpop.f32.mrf.mxu0
    %1520 = vmatprep.mubr.f32.mxu0 0.0
    %1521 = vmatmul.mubr.f32.gmra.mxu0 %v1411
    %v1522 = vpop.f32.mrf.mxu0
    %v1523 = vadd.f32 %v1368, %v1522
    %v1524 = vpop.f32.mrf.mxu0
    %1525 = vdwg.mxu0
    %v1526 = vsel %vm68, %v1488, -inf
    %1527 = vmax.xlane.f32.xlu0 %v1526
    %v1528 = vpop.xlane.xlu0 %1527
    %v1529 = vsel %vm68, %v1493, -inf
    %1530 = vmax.xlane.f32.xlu0 %v1529
    %v1531 = vpop.xlane.xlu0 %1530
    %v1532 = vsel %vm68, %v1498, -inf
    %1533 = vmax.xlane.f32.xlu0 %v1532
    %v1534 = vpop.xlane.xlu0 %1533
    %v1535 = vsel %vm68, %v1503, -inf
    %1536 = vmax.xlane.f32.xlu0 %v1535
    %v1537 = vpop.xlane.xlu0 %1536
    %v1538 = vsel %vm68, %v1508, -inf
    %1539 = vmax.xlane.f32.xlu0 %v1538
    %v1540 = vpop.xlane.xlu0 %1539
    %v1541 = vsel %vm68, %v1513, -inf
    %1542 = vmax.xlane.f32.xlu0 %v1541
    %v1543 = vpop.xlane.xlu0 %1542
    %v1544 = vsel %vm68, %v1518, -inf
    %1545 = vmax.xlane.f32.xlu0 %v1544
    %v1546 = vpop.xlane.xlu0 %1545
    %v1547 = vsel %vm68, %v1523, -inf
    %1548 = vmax.xlane.f32.xlu0 %v1547
    %v1549 = vpop.xlane.xlu0 %1548
    %v1550 = vsub.f32 %v1488, %v1528
    %v1551 = vsub.f32 %v1493, %v1531
    %v1552 = vsub.f32 %v1498, %v1534
    %v1553 = vsub.f32 %v1503, %v1537
    %v1554 = vsub.f32 %v1508, %v1540
    %v1555 = vsub.f32 %v1513, %v1543
    %v1556 = vsub.f32 %v1518, %v1546
    %v1557 = vsub.f32 %v1523, %v1549
    %v1558 = vmul.f32 %v1550, 1.442695
    %v1559 = vpow.pop %v1558
    %v1560 = vmul.f32 %v1551, 1.442695
    %v1561 = vpow.pop %v1560
    %v1562 = vmul.f32 %v1552, 1.442695
    %v1563 = vpow.pop %v1562
    %v1564 = vmul.f32 %v1553, 1.442695
    %v1565 = vpow.pop %v1564
    %v1566 = vmul.f32 %v1554, 1.442695
    %v1567 = vpow.pop %v1566
    %v1568 = vmul.f32 %v1555, 1.442695
    %v1569 = vpow.pop %v1568
    %v1570 = vmul.f32 %v1556, 1.442695
    %v1571 = vpow.pop %v1570
    %v1572 = vmul.f32 %v1557, 1.442695
    %v1573 = vpow.pop %v1572
    %v1574 = vsel %vm68, %v1559, 0.0
    %1575 = vadd.xlane.f32.xlu0 %v1574
    %v1576 = vpop.xlane.xlu0 %1575
    %v1577 = vsel %vm68, %v1561, 0.0
    %1578 = vadd.xlane.f32.xlu0 %v1577
    %v1579 = vpop.xlane.xlu0 %1578
    %v1580 = vsel %vm68, %v1563, 0.0
    %1581 = vadd.xlane.f32.xlu0 %v1580
    %v1582 = vpop.xlane.xlu0 %1581
    %v1583 = vsel %vm68, %v1565, 0.0
    %1584 = vadd.xlane.f32.xlu0 %v1583
    %v1585 = vpop.xlane.xlu0 %1584
    %v1586 = vsel %vm68, %v1567, 0.0
    %1587 = vadd.xlane.f32.xlu0 %v1586
    %v1588 = vpop.xlane.xlu0 %1587
    %v1589 = vsel %vm68, %v1569, 0.0
    %1590 = vadd.xlane.f32.xlu0 %v1589
    %v1591 = vpop.xlane.xlu0 %1590
    %v1592 = vsel %vm68, %v1571, 0.0
    %1593 = vadd.xlane.f32.xlu0 %v1592
    %v1594 = vpop.xlane.xlu0 %1593
    %v1595 = vsel %vm68, %v1573, 0.0
    %1596 = vadd.xlane.f32.xlu0 %v1595
    %v1597 = vpop.xlane.xlu0 %1596
    %v1598 = vrcp.pop %v1576
    %v1599 = vmul.f32 %v1559, %v1598
    %v1600 = vrcp.pop %v1579
    %v1601 = vmul.f32 %v1561, %v1600
    %v1602 = vrcp.pop %v1582
    %v1603 = vmul.f32 %v1563, %v1602
    %v1604 = vrcp.pop %v1585
    %v1605 = vmul.f32 %v1565, %v1604
    %v1606 = vrcp.pop %v1588
    %v1607 = vmul.f32 %v1567, %v1606
    %v1608 = vrcp.pop %v1591
    %v1609 = vmul.f32 %v1569, %v1608
    %v1610 = vrcp.pop %v1594
    %v1611 = vmul.f32 %v1571, %v1610
    %v1612 = vrcp.pop %v1597
    %v1613 = vmul.f32 %v1573, %v1612
    %1618 = vrot.lane.b32.xlu0 %v1220, 64
    %v1619 = vpop.permute.xlu0 %1618
    %1620 = vrot.lane.b32.xlu0 %v1225, 64
    %v1621 = vpop.permute.xlu0 %1620
    %1622 = vrot.lane.b32.xlu0 %v1230, 64
    %v1623 = vpop.permute.xlu0 %1622
    %1624 = vrot.lane.b32.xlu0 %v1235, 64
    %v1625 = vpop.permute.xlu0 %1624
    %v1631 = vsel %vm68, %v1599, 0
    %v1634 = vsel %vm68, %v1601, 0
    %v1637 = vsel %vm68, %v1603, 0
    %v1640 = vsel %vm68, %v1605, 0
    %v1643 = vsel %vm68, %v1607, 0
    %v1646 = vsel %vm68, %v1609, 0
    %v1649 = vsel %vm68, %v1611, 0
    %v1652 = vsel %vm68, %v1613, 0
    %1654 = vmatprep.subr.mxu0 0.0
    %1655 = vmatpush1.msra.mxu0 0.0
    %1656 = vmatprep.subr.mxu0 0.0
    %1657 = vmatpush1.msra.mxu0 0.0
    %1658 = vmatprep.subr.mxu0 0.0
    %1659 = vmatpush1.msra.mxu0 0.0
    %1660 = vmatprep.subr.mxu0 0.0
    %1661 = vmatpush1.msra.mxu0 0.0
    %1662 = vmatprep.subr.mxu0 0.0
    %1663 = vmatpush1.msra.mxu0 0.0
    %1664 = vmatprep.subr.mxu0 0.0
    %1665 = vmatpush1.msra.mxu0 0.0
    %1666 = vmatprep.subr.mxu0 0.0
    %1667 = vmatpush1.msra.mxu0 0.0
    %1668 = vmatprep.subr.mxu0 0.0
    %1669 = vmatpush1.msra.mxu0 0.0
    %1670 = vmatprep.subr.mxu0 0.0
    %1671 = vmatpush1.msra.mxu0 0.0
    %1672 = vmatprep.subr.mxu0 0.0
    %1673 = vmatpush1.msra.mxu0 0.0
    %1674 = vmatprep.subr.mxu0 0.0
    %1675 = vmatpush1.msra.mxu0 0.0
    %1676 = vmatprep.subr.mxu0 0.0
    %1677 = vmatpush1.msra.mxu0 0.0
    %1678 = vmatprep.subr.mxu0 0.0
    %1679 = vmatpush1.msra.mxu0 %v1625
    %1680 = vmatprep.subr.mxu0 0.0
    %1681 = vmatpush1.msra.mxu0 %v1623
    %1682 = vmatprep.subr.mxu0 0.0
    %1683 = vmatpush1.msra.mxu0 %v1621
    %1684 = vmatprep.subr.mxu0 0.0
    %1685 = vmatpush1.msra.mxu0 %v1619
    %1686 = vmatprep.subr.mxu0 0.0
    %1687 = vmatpush2.msra.mxu0 0.0
    %1688 = vmatprep.subr.mxu0 0.0
    %1689 = vmatpush2.msra.mxu0 0.0
    %1690 = vmatprep.subr.mxu0 0.0
    %1691 = vmatpush2.msra.mxu0 0.0
    %1692 = vmatprep.subr.mxu0 0.0
    %1693 = vmatpush2.msra.mxu0 0.0
    %1694 = vmatprep.subr.mxu0 0.0
    %1695 = vmatpush2.msra.mxu0 0.0
    %1696 = vmatprep.subr.mxu0 0.0
    %1697 = vmatpush2.msra.mxu0 0.0
    %1698 = vmatprep.subr.mxu0 0.0
    %1699 = vmatpush2.msra.mxu0 0.0
    %1700 = vmatprep.subr.mxu0 0.0
    %1701 = vmatpush2.msra.mxu0 0.0
    %1702 = vmatprep.subr.mxu0 0.0
    %1703 = vmatpush2.msra.mxu0 0.0
    %1704 = vmatprep.subr.mxu0 0.0
    %1705 = vmatpush2.msra.mxu0 0.0
    %1706 = vmatprep.subr.mxu0 0.0
    %1707 = vmatpush2.msra.mxu0 0.0
    %1708 = vmatprep.subr.mxu0 0.0
    %1709 = vmatpush2.msra.mxu0 0.0
    %1710 = vmatprep.subr.mxu0 0.0
    %1711 = vmatpush2.msra.mxu0 0.0
    %1712 = vmatprep.subr.mxu0 0.0
    %1713 = vmatpush2.msra.mxu0 0.0
    %1714 = vmatprep.subr.mxu0 0.0
    %1715 = vmatpush2.msra.mxu0 0.0
    %1716 = vmatprep.subr.mxu0 0.0
    %1717 = vmatpush2.msra.mxu0 0.0
    %1718 = vmatprep.mubr.f32.mxu0 0.0
    %1719 = vmatmul.mubr.f32.gmra.mxu0 %v1631
    %v1720 = vpop.f32.mrf.mxu0
    %v1721 = vadd.f32 0.0, %v1720
    %v1722 = vpop.f32.mrf.mxu0
    %1723 = vmatprep.mubr.f32.mxu0 0.0
    %1724 = vmatmul.mubr.f32.gmra.mxu0 %v1634
    %v1725 = vpop.f32.mrf.mxu0
    %v1726 = vadd.f32 0.0, %v1725
    %v1727 = vpop.f32.mrf.mxu0
    %1728 = vmatprep.mubr.f32.mxu0 0.0
    %1729 = vmatmul.mubr.f32.gmra.mxu0 %v1637
    %v1730 = vpop.f32.mrf.mxu0
    %v1731 = vadd.f32 0.0, %v1730
    %v1732 = vpop.f32.mrf.mxu0
    %1733 = vmatprep.mubr.f32.mxu0 0.0
    %1734 = vmatmul.mubr.f32.gmra.mxu0 %v1640
    %v1735 = vpop.f32.mrf.mxu0
    %v1736 = vadd.f32 0.0, %v1735
    %v1737 = vpop.f32.mrf.mxu0
    %1738 = vmatprep.mubr.f32.mxu0 0.0
    %1739 = vmatmul.mubr.f32.gmra.mxu0 %v1643
    %v1740 = vpop.f32.mrf.mxu0
    %v1741 = vadd.f32 0.0, %v1740
    %v1742 = vpop.f32.mrf.mxu0
    %1743 = vmatprep.mubr.f32.mxu0 0.0
    %1744 = vmatmul.mubr.f32.gmra.mxu0 %v1646
    %v1745 = vpop.f32.mrf.mxu0
    %v1746 = vadd.f32 0.0, %v1745
    %v1747 = vpop.f32.mrf.mxu0
    %1748 = vmatprep.mubr.f32.mxu0 0.0
    %1749 = vmatmul.mubr.f32.gmra.mxu0 %v1649
    %v1750 = vpop.f32.mrf.mxu0
    %v1751 = vadd.f32 0.0, %v1750
    %v1752 = vpop.f32.mrf.mxu0
    %1753 = vmatprep.mubr.f32.mxu0 0.0
    %1754 = vmatmul.mubr.f32.gmra.mxu0 %v1652
    %v1755 = vpop.f32.mrf.mxu0
    %v1756 = vadd.f32 0.0, %v1755
    %v1757 = vpop.f32.mrf.mxu0
    %1758 = vdwg.mxu0
    %v1759 = vmul.f32 %v1721, %v265
    %v1760 = vmul.f32 %v1726, %v266
    %v1761 = vmul.f32 %v1731, %v267
    %v1762 = vmul.f32 %v1736, %v268
    %v1763 = vmul.f32 %v1741, %v269
    %v1764 = vmul.f32 %v1746, %v270
    %v1765 = vmul.f32 %v1751, %v271
    %v1766 = vmul.f32 %v1756, %v272
    %v1767 = vadd.f32 %v1759, %v1761
    %v1768 = vadd.f32 %v1760, %v1762
    %v1769 = vadd.f32 %v1767, %v1763
    %v1770 = vadd.f32 %v1768, %v1764
    %v1771 = vadd.f32 %v1769, %v1765
    %v1772 = vadd.f32 %v1770, %v1766
    %v1773 = vlaneseq
    %v1774 = vshrl.u32 %v1773, 7
    %v1775 = vsub.s32 1, %v1774
    %v1776 = vrot.slane %v64, %v1775
    %v1778 = vsel %vm68, %v1771, 0
    %v1781 = vsel %vm68, %v1772, 0
    %1783 = vmatprep.subr.mxu0 0.0
    %1784 = vmatpush1.msra.mxu0 0.0
    %1785 = vmatprep.subr.mxu0 0.0
    %1786 = vmatpush1.msra.mxu0 0.0
    %1787 = vmatprep.subr.mxu0 0.0
    %1788 = vmatpush1.msra.mxu0 0.0
    %1789 = vmatprep.subr.mxu0 0.0
    %1790 = vmatpush1.msra.mxu0 0.0
    %1791 = vmatprep.subr.mxu0 0.0
    %1792 = vmatpush1.msra.mxu0 0.0
    %1793 = vmatprep.subr.mxu0 0.0
    %1794 = vmatpush1.msra.mxu0 0.0
    %1795 = vmatprep.subr.mxu0 0.0
    %1796 = vmatpush1.msra.mxu0 0.0
    %1797 = vmatprep.subr.mxu0 0.0
    %1798 = vmatpush1.msra.mxu0 0.0
    %1799 = vmatprep.subr.mxu0 0.0
    %1800 = vmatpush1.msra.mxu0 0.0
    %1801 = vmatprep.subr.mxu0 0.0
    %1802 = vmatpush1.msra.mxu0 0.0
    %1803 = vmatprep.subr.mxu0 0.0
    %1804 = vmatpush1.msra.mxu0 0.0
    %1805 = vmatprep.subr.mxu0 0.0
    %1806 = vmatpush1.msra.mxu0 0.0
    %1807 = vmatprep.subr.mxu0 0.0
    %1808 = vmatpush1.msra.mxu0 %v51
    %1809 = vmatprep.subr.mxu0 0.0
    %1810 = vmatpush1.msra.mxu0 %v50
    %1811 = vmatprep.subr.mxu0 0.0
    %1812 = vmatpush1.msra.mxu0 %v49
    %1813 = vmatprep.subr.mxu0 0.0
    %1814 = vmatpush1.msra.mxu0 %v48
    %1815 = vmatprep.subr.mxu0 0.0
    %1816 = vmatpush2.msra.mxu0 0.0
    %1817 = vmatprep.subr.mxu0 0.0
    %1818 = vmatpush2.msra.mxu0 0.0
    %1819 = vmatprep.subr.mxu0 0.0
    %1820 = vmatpush2.msra.mxu0 0.0
    %1821 = vmatprep.subr.mxu0 0.0
    %1822 = vmatpush2.msra.mxu0 0.0
    %1823 = vmatprep.subr.mxu0 0.0
    %1824 = vmatpush2.msra.mxu0 0.0
    %1825 = vmatprep.subr.mxu0 0.0
    %1826 = vmatpush2.msra.mxu0 0.0
    %1827 = vmatprep.subr.mxu0 0.0
    %1828 = vmatpush2.msra.mxu0 0.0
    %1829 = vmatprep.subr.mxu0 0.0
    %1830 = vmatpush2.msra.mxu0 0.0
    %1831 = vmatprep.subr.mxu0 0.0
    %1832 = vmatpush2.msra.mxu0 0.0
    %1833 = vmatprep.subr.mxu0 0.0
    %1834 = vmatpush2.msra.mxu0 0.0
    %1835 = vmatprep.subr.mxu0 0.0
    %1836 = vmatpush2.msra.mxu0 0.0
    %1837 = vmatprep.subr.mxu0 0.0
    %1838 = vmatpush2.msra.mxu0 0.0
    %1839 = vmatprep.subr.mxu0 0.0
    %1840 = vmatpush2.msra.mxu0 0.0
    %1841 = vmatprep.subr.mxu0 0.0
    %1842 = vmatpush2.msra.mxu0 0.0
    %1843 = vmatprep.subr.mxu0 0.0
    %1844 = vmatpush2.msra.mxu0 0.0
    %1845 = vmatprep.subr.mxu0 0.0
    %1846 = vmatpush2.msra.mxu0 0.0
    %1847 = vmatprep.mubr.f32.mxu0 0.0
    %1848 = vmatmul.mubr.f32.gmra.mxu0 %v1778
    %v1849 = vpop.f32.mrf.mxu0
    %v1850 = vadd.f32 %v1776, %v1849
    %v1851 = vpop.f32.mrf.mxu0
    %1852 = vmatprep.mubr.f32.mxu0 0.0
    %1853 = vmatmul.mubr.f32.gmra.mxu0 %v1781
    %v1854 = vpop.f32.mrf.mxu0
    %v1855 = vadd.f32 %v1776, %v1854
    %v1856 = vpop.f32.mrf.mxu0
    %1857 = vdwg.mxu0
    %v1858 = vadd.f32 %v1085, %v1850
    %v1859 = vadd.f32 %v1086, %v1855
    %v1860 = vsel %vm68, %v1858, 0.0
    %1861 = vadd.xlane.f32.xlu0 %v1860
    %v1862 = vpop.xlane.xlu0 %1861
    %v1863 = vsel %vm68, %v1859, 0.0
    %1864 = vadd.xlane.f32.xlu0 %v1863
    %v1865 = vpop.xlane.xlu0 %1864
    %v1866 = vmul.f32 %v1862, %v1054
    %v1867 = vmul.f32 %v1865, %v1054
    %v1868 = vsub.f32 %v1858, %v1866
    %v1869 = vsub.f32 %v1859, %v1867
    %v1870 = vmul.f32 %v1868, %v1868
    %v1871 = vmul.f32 %v1869, %v1869
    %v1872 = vsel %vm68, %v1870, 0.0
    %1873 = vadd.xlane.f32.xlu0 %v1872
    %v1874 = vpop.xlane.xlu0 %1873
    %v1875 = vsel %vm68, %v1871, 0.0
    %1876 = vadd.xlane.f32.xlu0 %v1875
    %v1877 = vpop.xlane.xlu0 %1876
    %v1878 = vmul.f32 %v1874, %v1054
    %v1879 = vmul.f32 %v1877, %v1054
    %v1880 = vadd.f32 %v1878, 1e-05
    %v1881 = vadd.f32 %v1879, 1e-05
    %v1882 = vrsqrt.pop %v1880
    %v1883 = vrsqrt.pop %v1881
    %v1884 = vmul.f32 %v1868, %v1882
    %v1885 = vmul.f32 %v1869, %v1883
    %v1886 = vlaneseq
    %v1887 = vshrl.u32 %v1886, 7
    %v1888 = vsub.s32 6, %v1887
    %v1889 = vrot.slane %v64, %v1888
    %v1890 = vmul.f32 %v1884, %v1889
    %v1891 = vmul.f32 %v1885, %v1889
    %v1892 = vlaneseq
    %v1893 = vshrl.u32 %v1892, 7
    %v1894 = vsub.s32 7, %v1893
    %v1895 = vrot.slane %v64, %v1894
    %v1896 = vadd.f32 %v1890, %v1895
    %v1897 = vadd.f32 %v1891, %v1895
    %v1898 = vlaneseq
    %v1899 = vshrl.u32 %v1898, 7
    %v1900 = vsub.s32 2, %v1899
    %v1901 = vrot.slane %v64, %v1900
    %v1903 = vsel %vm68, %v1896, 0
    %v1906 = vsel %vm68, %v1897, 0
    %1908 = vmatprep.subr.mxu0 0.0
    %1909 = vmatpush1.msra.mxu0 0.0
    %1910 = vmatprep.subr.mxu0 0.0
    %1911 = vmatpush1.msra.mxu0 0.0
    %1912 = vmatprep.subr.mxu0 0.0
    %1913 = vmatpush1.msra.mxu0 0.0
    %1914 = vmatprep.subr.mxu0 0.0
    %1915 = vmatpush1.msra.mxu0 0.0
    %1916 = vmatprep.subr.mxu0 0.0
    %1917 = vmatpush1.msra.mxu0 0.0
    %1918 = vmatprep.subr.mxu0 0.0
    %1919 = vmatpush1.msra.mxu0 0.0
    %1920 = vmatprep.subr.mxu0 0.0
    %1921 = vmatpush1.msra.mxu0 0.0
    %1922 = vmatprep.subr.mxu0 0.0
    %1923 = vmatpush1.msra.mxu0 0.0
    %1924 = vmatprep.subr.mxu0 0.0
    %1925 = vmatpush1.msra.mxu0 0.0
    %1926 = vmatprep.subr.mxu0 0.0
    %1927 = vmatpush1.msra.mxu0 0.0
    %1928 = vmatprep.subr.mxu0 0.0
    %1929 = vmatpush1.msra.mxu0 0.0
    %1930 = vmatprep.subr.mxu0 0.0
    %1931 = vmatpush1.msra.mxu0 0.0
    %1932 = vmatprep.subr.mxu0 0.0
    %1933 = vmatpush1.msra.mxu0 %v55
    %1934 = vmatprep.subr.mxu0 0.0
    %1935 = vmatpush1.msra.mxu0 %v54
    %1936 = vmatprep.subr.mxu0 0.0
    %1937 = vmatpush1.msra.mxu0 %v53
    %1938 = vmatprep.subr.mxu0 0.0
    %1939 = vmatpush1.msra.mxu0 %v52
    %1940 = vmatprep.subr.mxu0 0.0
    %1941 = vmatpush2.msra.mxu0 0.0
    %1942 = vmatprep.subr.mxu0 0.0
    %1943 = vmatpush2.msra.mxu0 0.0
    %1944 = vmatprep.subr.mxu0 0.0
    %1945 = vmatpush2.msra.mxu0 0.0
    %1946 = vmatprep.subr.mxu0 0.0
    %1947 = vmatpush2.msra.mxu0 0.0
    %1948 = vmatprep.subr.mxu0 0.0
    %1949 = vmatpush2.msra.mxu0 0.0
    %1950 = vmatprep.subr.mxu0 0.0
    %1951 = vmatpush2.msra.mxu0 0.0
    %1952 = vmatprep.subr.mxu0 0.0
    %1953 = vmatpush2.msra.mxu0 0.0
    %1954 = vmatprep.subr.mxu0 0.0
    %1955 = vmatpush2.msra.mxu0 0.0
    %1956 = vmatprep.subr.mxu0 0.0
    %1957 = vmatpush2.msra.mxu0 0.0
    %1958 = vmatprep.subr.mxu0 0.0
    %1959 = vmatpush2.msra.mxu0 0.0
    %1960 = vmatprep.subr.mxu0 0.0
    %1961 = vmatpush2.msra.mxu0 0.0
    %1962 = vmatprep.subr.mxu0 0.0
    %1963 = vmatpush2.msra.mxu0 0.0
    %1964 = vmatprep.subr.mxu0 0.0
    %1965 = vmatpush2.msra.mxu0 0.0
    %1966 = vmatprep.subr.mxu0 0.0
    %1967 = vmatpush2.msra.mxu0 0.0
    %1968 = vmatprep.subr.mxu0 0.0
    %1969 = vmatpush2.msra.mxu0 0.0
    %1970 = vmatprep.subr.mxu0 0.0
    %1971 = vmatpush2.msra.mxu0 0.0
    %1972 = vmatprep.mubr.f32.mxu0 0.0
    %1973 = vmatmul.mubr.f32.gmra.mxu0 %v1903
    %v1974 = vpop.f32.mrf.mxu0
    %v1975 = vadd.f32 %v1901, %v1974
    %v1976 = vpop.f32.mrf.mxu0
    %1977 = vmatprep.mubr.f32.mxu0 0.0
    %1978 = vmatmul.mubr.f32.gmra.mxu0 %v1906
    %v1979 = vpop.f32.mrf.mxu0
    %v1980 = vadd.f32 %v1901, %v1979
    %v1981 = vpop.f32.mrf.mxu0
    %1982 = vdwg.mxu0
    %v1983 = vmul.f32 %v1975, 0.5
    %v1984 = vmul.f32 %v1980, 0.5
    %v1985 = vmul.f32 %v1975, 0.70710677
    %v1986 = vmul.f32 %v1980, 0.70710677
    %vm1987 = vcmp.ge.f32.partialorder %v1985, 0.0
    %vm1988 = vcmp.ge.f32.partialorder %v1986, 0.0
    %v1989 = vsel %vm1987, 1.0, -1.0
    %v1990 = vsel %vm1988, 1.0, -1.0
    %v1991 = vand.u32 2147483647, %v1985
    %v1992 = vand.u32 2147483647, %v1986
    %v1993 = vmul.f32 %v1991, 0.3275911
    %v1994 = vmul.f32 %v1992, 0.3275911
    %v1995 = vadd.f32 %v1993, 1.0
    %v1996 = vadd.f32 %v1994, 1.0
    %v1997 = vrcp.pop %v1995
    %v1998 = vmul.f32 1.0, %v1997
    %v1999 = vrcp.pop %v1996
    %v2000 = vmul.f32 1.0, %v1999
    %v2001 = vmul.f32 %v1998, 1.0614054
    %v2002 = vmul.f32 %v2000, 1.0614054
    %v2003 = vadd.f32 %v2001, -1.4531521
    %v2004 = vadd.f32 %v2002, -1.4531521
    %v2005 = vmul.f32 %v2003, %v1998
    %v2006 = vmul.f32 %v2004, %v2000
    %v2007 = vadd.f32 %v2005, 1.4214138
    %v2008 = vadd.f32 %v2006, 1.4214138
    %v2009 = vmul.f32 %v2007, %v1998
    %v2010 = vmul.f32 %v2008, %v2000
    %v2011 = vadd.f32 %v2009, -0.28449672
    %v2012 = vadd.f32 %v2010, -0.28449672
    %v2013 = vmul.f32 %v2011, %v1998
    %v2014 = vmul.f32 %v2012, %v2000
    %v2015 = vadd.f32 %v2013, 0.2548296
    %v2016 = vadd.f32 %v2014, 0.2548296
    %v2017 = vmul.f32 %v2015, %v1998
    %v2018 = vmul.f32 %v2016, %v2000
    %v2019 = vsub.f32 0.0, %v1991
    %v2020 = vsub.f32 0.0, %v1992
    %v2021 = vmul.f32 %v2019, %v1991
    %v2022 = vmul.f32 %v2020, %v1992
    %v2023 = vmul.f32 %v2021, 1.442695
    %v2024 = vpow.pop %v2023
    %v2025 = vmul.f32 %v2022, 1.442695
    %v2026 = vpow.pop %v2025
    %v2027 = vmul.f32 %v2017, %v2024
    %v2028 = vmul.f32 %v2018, %v2026
    %v2029 = vsub.f32 1.0, %v2027
    %v2030 = vsub.f32 1.0, %v2028
    %v2031 = vmul.f32 %v1989, %v2029
    %v2032 = vmul.f32 %v1990, %v2030
    %v2033 = vadd.f32 %v2031, 1.0
    %v2034 = vadd.f32 %v2032, 1.0
    %v2035 = vmul.f32 %v1983, %v2033
    %v2036 = vmul.f32 %v1984, %v2034
    %v2037 = vlaneseq
    %v2038 = vshrl.u32 %v2037, 7
    %v2039 = vsub.s32 3, %v2038
    %v2040 = vrot.slane %v64, %v2039
    %vm2041 = vcmask 523264
    %v2043 = vsel %vm2041, %v2035, 0
    %v2046 = vsel %vm2041, %v2036, 0
    %2048 = vmatprep.subr.mxu0 0.0
    %2049 = vmatpush1.msra.mxu0 0.0
    %2050 = vmatprep.subr.mxu0 0.0
    %2051 = vmatpush1.msra.mxu0 0.0
    %2052 = vmatprep.subr.mxu0 0.0
    %2053 = vmatpush1.msra.mxu0 0.0
    %2054 = vmatprep.subr.mxu0 0.0
    %2055 = vmatpush1.msra.mxu0 0.0
    %2056 = vmatprep.subr.mxu0 0.0
    %2057 = vmatpush1.msra.mxu0 0.0
    %2058 = vmatprep.subr.mxu0 0.0
    %2059 = vmatpush1.msra.mxu0 0.0
    %2060 = vmatprep.subr.mxu0 0.0
    %2061 = vmatpush1.msra.mxu0 0.0
    %2062 = vmatprep.subr.mxu0 0.0
    %2063 = vmatpush1.msra.mxu0 0.0
    %2064 = vmatprep.subr.mxu0 0.0
    %2065 = vmatpush1.msra.mxu0 %v63
    %2066 = vmatprep.subr.mxu0 0.0
    %2067 = vmatpush1.msra.mxu0 %v62
    %2068 = vmatprep.subr.mxu0 0.0
    %2069 = vmatpush1.msra.mxu0 %v61
    %2070 = vmatprep.subr.mxu0 0.0
    %2071 = vmatpush1.msra.mxu0 %v60
    %2072 = vmatprep.subr.mxu0 0.0
    %2073 = vmatpush1.msra.mxu0 %v59
    %2074 = vmatprep.subr.mxu0 0.0
    %2075 = vmatpush1.msra.mxu0 %v58
    %2076 = vmatprep.subr.mxu0 0.0
    %2077 = vmatpush1.msra.mxu0 %v57
    %2078 = vmatprep.subr.mxu0 0.0
    %2079 = vmatpush1.msra.mxu0 %v56
    %2080 = vmatprep.subr.mxu0 0.0
    %2081 = vmatpush2.msra.mxu0 0.0
    %2082 = vmatprep.subr.mxu0 0.0
    %2083 = vmatpush2.msra.mxu0 0.0
    %2084 = vmatprep.subr.mxu0 0.0
    %2085 = vmatpush2.msra.mxu0 0.0
    %2086 = vmatprep.subr.mxu0 0.0
    %2087 = vmatpush2.msra.mxu0 0.0
    %2088 = vmatprep.subr.mxu0 0.0
    %2089 = vmatpush2.msra.mxu0 0.0
    %2090 = vmatprep.subr.mxu0 0.0
    %2091 = vmatpush2.msra.mxu0 0.0
    %2092 = vmatprep.subr.mxu0 0.0
    %2093 = vmatpush2.msra.mxu0 0.0
    %2094 = vmatprep.subr.mxu0 0.0
    %2095 = vmatpush2.msra.mxu0 0.0
    %2096 = vmatprep.subr.mxu0 0.0
    %2097 = vmatpush2.msra.mxu0 0.0
    %2098 = vmatprep.subr.mxu0 0.0
    %2099 = vmatpush2.msra.mxu0 0.0
    %2100 = vmatprep.subr.mxu0 0.0
    %2101 = vmatpush2.msra.mxu0 0.0
    %2102 = vmatprep.subr.mxu0 0.0
    %2103 = vmatpush2.msra.mxu0 0.0
    %2104 = vmatprep.subr.mxu0 0.0
    %2105 = vmatpush2.msra.mxu0 0.0
    %2106 = vmatprep.subr.mxu0 0.0
    %2107 = vmatpush2.msra.mxu0 0.0
    %2108 = vmatprep.subr.mxu0 0.0
    %2109 = vmatpush2.msra.mxu0 0.0
    %2110 = vmatprep.subr.mxu0 0.0
    %2111 = vmatpush2.msra.mxu0 0.0
    %2112 = vmatprep.mubr.f32.mxu0 0.0
    %2113 = vmatmul.mubr.f32.gmra.mxu0 %v2043
    %v2114 = vpop.f32.mrf.mxu0
    %v2115 = vadd.f32 %v2040, %v2114
    %v2116 = vpop.f32.mrf.mxu0
    %2117 = vmatprep.mubr.f32.mxu0 0.0
    %2118 = vmatmul.mubr.f32.gmra.mxu0 %v2046
    %v2119 = vpop.f32.mrf.mxu0
    %v2120 = vadd.f32 %v2040, %v2119
    %v2121 = vpop.f32.mrf.mxu0
    %2122 = vdwg.mxu0
    %v2123 = vadd.f32 %v1896, %v2115
    %v2124 = vadd.f32 %v1897, %v2120
    %v2125 = vsel %vm68, %v2123, 0.0
    %2126 = vadd.xlane.f32.xlu0 %v2125
    %v2127 = vpop.xlane.xlu0 %2126
    %v2128 = vsel %vm68, %v2124, 0.0
    %2129 = vadd.xlane.f32.xlu0 %v2128
    %v2130 = vpop.xlane.xlu0 %2129
    %v2131 = vmul.f32 %v2127, %v1054
    %v2132 = vmul.f32 %v2130, %v1054
    %v2133 = vsub.f32 %v2123, %v2131
    %v2134 = vsub.f32 %v2124, %v2132
    %v2135 = vmul.f32 %v2133, %v2133
    %v2136 = vmul.f32 %v2134, %v2134
    %v2137 = vsel %vm68, %v2135, 0.0
    %2138 = vadd.xlane.f32.xlu0 %v2137
    %v2139 = vpop.xlane.xlu0 %2138
    %v2140 = vsel %vm68, %v2136, 0.0
    %2141 = vadd.xlane.f32.xlu0 %v2140
    %v2142 = vpop.xlane.xlu0 %2141
    %v2143 = vmul.f32 %v2139, %v1054
    %v2144 = vmul.f32 %v2142, %v1054
    %v2145 = vadd.f32 %v2143, 1e-05
    %v2146 = vadd.f32 %v2144, 1e-05
    %v2147 = vrsqrt.pop %v2145
    %v2148 = vrsqrt.pop %v2146
    %v2149 = vmul.f32 %v2133, %v2147
    %v2150 = vmul.f32 %v2134, %v2148
    %v2151 = vlaneseq
    %v2152 = vshrl.u32 %v2151, 7
    %v2153 = vsub.s32 0, %v2152
    %v2154 = vrot.slane %v65, %v2153
    %v2155 = vmul.f32 %v2149, %v2154
    %v2156 = vmul.f32 %v2150, %v2154
    %v2157 = vlaneseq
    %v2158 = vshrl.u32 %v2157, 7
    %v2159 = vsub.s32 1, %v2158
    %v2160 = vrot.slane %v65, %v2159
    %v2161 = vadd.f32 %v2155, %v2160
    %v2162 = vadd.f32 %v2156, %v2160
    %2163 = vst.msk [vmem:[#allocation2] sm:$0xff] %vm68, %v2161
    %2164 = vst.msk [vmem:[#allocation2 + $0x8] sm:$0xff] %vm68, %v2162
    // Predicated region
    $region26: #{attention_block_forward.1} parent=1 // pred_check
      _
    $region27: #{attention_block_forward.1} parent=1 // pred_check_branch
      %2166 = sbr.rel (0) target = $region29
    $region28: #{attention_block_forward.1} parent=1 // pred_region
      %s2168 = ssub.s32 256, 256
      %2169 = vsyncadd [#allocation3], %s2168
      %s2170 = sshll.u32 [#allocation2], 4
      %s2171 = int_to_ptr.vmem [resolvable:$true] %s2170
      %2176 = dma.vmem_to_hbm [thread:$0]  %s2171, 256, %s6, [#allocation3], 128, 128, 8
    $region29: #{attention_block_forward.1} parent=1 // pred_fallthru
      _
    // Predicated region
    $region30: #{attention_block_forward.1} parent=1 // pred_check
      _
    $region31: #{attention_block_forward.1} parent=1 // pred_check_branch
      %2178 = sbr.rel (0) target = $region33
    $region32: #{attention_block_forward.1} parent=1 // pred_region
      %2179 = dma.done [#allocation3], 256
    $region33: #{attention_block_forward.1} parent=1 // pred_fallthru
      _
    %2180 = vsyncpa [#allocation3], 1

</llo_original>
